<compile_context>
chip_gen: v7x
topology: tpu7x:2x2x1
jax: 0.10.0
libtpu: 0.0.40
codegen_flags: <defaults>
</compile_context>

<pallas_src>
import jax
import jax.numpy as jnp
from jax.experimental import pallas as pl
from jax.experimental.pallas import tpu as pltpu

THRESH = 0.5          # LIF firing threshold (standard STBP default)
DECAY = 0.2           # membrane decay (standard STBP default)
ACT_QLEVELS = 16.0    # Quantize_Spike(0, 4): 4-bit activation quantization grid
WGT_QLEVELS = 8.0     # QuantLinear: 4-bit symmetric weight quantization grid

TIME_BLOCK = 32       # timesteps per recurrent grid step (amortizes ~0.35us/step overhead)
UNROLL = 8            # partial unroll of the in-block time loop
FF_ROWS_TARGET = 1024 # Phase-1 rows per grid step (HBM-bound -> big lane-dense tiles)
NEG_FILL = -1.0e4     # drive value for padded tail timesteps (guarantees no spike)


def _round_up(x, m):
    return ((x + m - 1) // m) * m


def _num_tensorcores_per_chip():
    # v7x has 2 TensorCores per chip; v5e/v6e have 1.  On single-TC chips the grid is a
    # serial loop, so batch-sharding would just halve M of the recurrent matmul and run
    # two full serial recurrence sweeps back-to-back.
    try:
        kind = jax.devices()[0].device_kind.lower()
    except Exception:
        return 1
    return 2 if "v7" in kind else 1


# --------------------------------------------------------------------------
# Phase 1: batched feed-forward drive   d = fc2(quant(relu(fc1(x)))) + (b2 + br)
# --------------------------------------------------------------------------
def ff_kernel(x_ref, w1_ref, b1_ref, w2_ref, b2_ref, d_ref):
    # x_ref is already bf16; weights bf16; accumulate in f32 on the MXU.
    h = jnp.dot(x_ref[...], w1_ref[...], preferred_element_type=jnp.float32) + b1_ref[...]
    h = jnp.maximum(h, 0.0)
    # TODO(synk): exact Quantize_Spike(0, 4) definition not given in the source;
    # modeled as 4-bit uniform quantization of the (non-negative) activations.
    h = jnp.round(h * ACT_QLEVELS) * (1.0 / ACT_QLEVELS)
    d = jnp.dot(h.astype(jnp.bfloat16), w2_ref[...],
                preferred_element_type=jnp.float32) + b2_ref[...]
    d_ref[...] = d.astype(d_ref.dtype)                       # store drive in bf16


# --------------------------------------------------------------------------
# Phase 2: recurrent LIF update (only spike_prev @ wr is truly sequential)
# --------------------------------------------------------------------------
def make_recurrent_kernel(time_block, unroll):
    def kernel(drive_ref, wr_ref, sum_ref, mem_sc, spk_sc):
        tblk = pl.program_id(1)

        @pl.when(tblk == 0)
        def _init():
            mem_sc[...] = jnp.zeros(mem_sc.shape, mem_sc.dtype)
            spk_sc[...] = jnp.zeros(spk_sc.shape, spk_sc.dtype)
            sum_ref[...] = jnp.zeros(sum_ref.shape, sum_ref.dtype)

        # TODO(synk): pinning wr in the MXU weight registers via
        # pltpu.matmul_push_rhs / matmul_acc_lhs / matmul_pop could further shorten the
        # per-step MXU round trip; only worth doing if Mosaic doesn't hoist it already.
        def step(i, carry):
            spike_prev = spk_sc[...]                               # bf16 (Bb,H4), exact 0/1
            # Decay term depends only on t-1 state -> scheduler overlaps it with the matmul.
            decay = mem_sc[...] * (DECAY * (1.0 - spike_prev.astype(jnp.float32)))
            rec = jnp.dot(spike_prev, wr_ref[...],
                          preferred_element_type=jnp.float32)
            mem = decay + drive_ref[i].astype(jnp.float32) + rec   # bias already folded in
            fired = mem > THRESH
            mem_sc[...] = mem
            spk_sc[...] = fired.astype(jnp.bfloat16)               # feeds next step's matmul
            sum_ref[...] = sum_ref[...] + fired.astype(jnp.float32)  # off the serial chain
            return carry

        jax.lax.fori_loop(0, time_block, step, 0, unroll=unroll)

    return kernel


# --------------------------------------------------------------------------
# Forward pass
# --------------------------------------------------------------------------
def srnn_forward(inputs, params, *, time_block=TIME_BLOCK):
    """inputs: int32 (batch, seq).  Returns (outs (B,2), num_spikes scalar, num_sops (1,))."""
    (emb_table, w1, b1, w2, b2, wr, br, w3, b3) = params
    B, S = inputs.shape
    E_in = emb_table.shape[1]          # 100
    E_hid = w1.shape[1]                # embed_size
    H4 = w2.shape[1]                   # 4 * num_hiddens

    TB = min(time_block, _round_up(S, 8))
    B_pad = _round_up(B, 8)
    S_pad = _round_up(S, TB)
    E_in_pad = _round_up(E_in, 128)
    E_hid_pad = _round_up(E_hid, 128)
    H4_pad = _round_up(H4, 128)

    # Batch shards only on multi-TC chips; keep Bb as large as possible otherwise so the
    # per-step recurrent matmul has the biggest M it can get.
    n_bshards = 1
    if _num_tensorcores_per_chip() > 1 and B_pad >= 16 and B_pad % 16 == 0:
        n_bshards = 2
    Bb = B_pad // n_bshards

    # ---- glue: embedding lookup in time-major order (matches inputs.permute(1,0)) ----
    emb = emb_table[inputs.T]                                            # (S, B, 100)
    emb = jnp.pad(emb, ((0, S_pad - S), (0, B_pad - B), (0, E_in_pad - E_in)))

    pad2 = lambda a, r, c: jnp.pad(a, ((0, r - a.shape[0]), (0, c - a.shape[1])))
    w1p = pad2(w1, E_in_pad, E_hid_pad).astype(jnp.bfloat16)   # MXU operands in bf16
    b1p = pad2(b1, 1, E_hid_pad)                               # biases stay f32
    w2p = pad2(w2, E_hid_pad, H4_pad).astype(jnp.bfloat16)
    b2p = pad2(b2 + br, 1, H4_pad)          # fold recurrent bias into the drive bias
    wrp = pad2(wr, H4_pad, H4_pad).astype(jnp.bfloat16)

    # ---- phase 1: batched feed-forward drive over all (S_pad * B_pad) rows ----
    N = S_pad * B_pad
    # Row tile: largest multiple of B_pad that divides N and is <= FF_ROWS_TARGET.
    k = max(1, min(S_pad, FF_ROWS_TARGET // B_pad))
    while S_pad % k:
        k -= 1
    Tr = k * B_pad
    x2d = emb.reshape(N, E_in_pad).astype(jnp.bfloat16)        # bf16 input (HBM-bound)

    drive = pl.pallas_call(
        ff_kernel,
        out_shape=jax.ShapeDtypeStruct((N, H4_pad), jnp.bfloat16),   # bf16 drive
        grid_spec=pltpu.PrefetchScalarGridSpec(
            num_scalar_prefetch=0,
            grid=(N // Tr,),
            in_specs=[
                pl.BlockSpec((Tr, E_in_pad), lambda r: (r, 0)),
                pl.BlockSpec((E_in_pad, E_hid_pad), lambda r: (0, 0)),
                pl.BlockSpec((1, E_hid_pad), lambda r: (0, 0)),
                pl.BlockSpec((E_hid_pad, H4_pad), lambda r: (0, 0)),
                pl.BlockSpec((1, H4_pad), lambda r: (0, 0)),
            ],
            out_specs=pl.BlockSpec((Tr, H4_pad), lambda r: (r, 0)),
        ),
        compiler_params=pltpu.CompilerParams(dimension_semantics=("parallel",)),
    )(x2d, w1p, b1p, w2p, b2p)
    drive = drive.reshape(S_pad, B_pad, H4_pad)

    # Padded tail timesteps get a large negative drive -> guaranteed no spikes, so the
    # recurrent kernel needs no per-step tail gate on its serial dependence chain.
    # TODO(synk): if bf16 drive storage needs validation vs f32 near THRESH, flip the
    # out_shape/scratch dtypes back to f32 and re-compare spike trains.
    if S_pad > S:
        drive = drive.at[S:].set(NEG_FILL)

    # ---- phase 2: recurrent LIF with time-blocked grid ----
    unroll = min(UNROLL, TB)
    rec_kernel = make_recurrent_kernel(TB, unroll)
    sum_spike = pl.pallas_call(
        rec_kernel,
        out_shape=jax.ShapeDtypeStruct((B_pad, H4_pad), jnp.float32),
        grid_spec=pltpu.PrefetchScalarGridSpec(
            num_scalar_prefetch=0,
            grid=(n_bshards, S_pad // TB),
            in_specs=[
                pl.BlockSpec((TB, Bb, H4_pad), lambda b, t: (t, b, 0)),  # drive slab (bf16)
                pl.BlockSpec((H4_pad, H4_pad), lambda b, t: (0, 0)),     # recu_fc2 weight
            ],
            out_specs=pl.BlockSpec((Bb, H4_pad), lambda b, t: (b, 0)),   # spike sum
            scratch_shapes=[
                pltpu.VMEM((Bb, H4_pad), jnp.float32),                   # h2_mem (f32)
                pltpu.VMEM((Bb, H4_pad), jnp.bfloat16),                  # h2_spike (0/1 exact)
            ],
        ),
        compiler_params=pltpu.CompilerParams(
            # TODO(synk): on v7x verify the "parallel" batch axis actually lands on both
            # TensorCores (xprof); otherwise switch to pltpu.CORE_PARALLEL / pl.core_map.
            dimension_semantics=("parallel", "arbitrary"),               # batch | time
        ),
    )(drive, wrp)

    # ---- glue: fc3 readout + spike statistics (tiny, lane-sparse -> plain JAX) ----
    s = sum_spike[:B, :H4]
    outs = s @ w3 + b3
    num_spikes = jnp.sum(s) / B
    # TODO(synk): mem_update's exact `sops` formula is not given; counting the spikes
    # emitted per step as the synaptic-operation proxy (== total spikes / B).
    num_sops = (jnp.sum(s) / B).reshape(1)
    return outs, num_spikes, num_sops


def make_params(key, vocab_size, embed_size, num_hiddens):
    """Deterministic synthetic parameters with the shapes implied by SRNN.__init__."""
    H4 = 4 * num_hiddens
    ks = jax.random.split(key, 9)
    nrm = lambda k, shp, s: (s * jax.random.normal(k, shp, jnp.float32))
    # TODO(synk): QuantLinear quantization details unknown; modeled as 4-bit grid.
    quantw = lambda w: jnp.round(w * WGT_QLEVELS) / WGT_QLEVELS

    emb_table = nrm(ks[0], (vocab_size, 100), 0.1)
    w1 = nrm(ks[1], (100, embed_size), 0.1)
    b1 = nrm(ks[2], (1, embed_size), 0.05)
    w2 = quantw(nrm(ks[3], (embed_size, H4), 0.1))
    b2 = nrm(ks[4], (1, H4), 0.05)
    wr = quantw(nrm(ks[5], (H4, H4), 0.1))
    br = nrm(ks[6], (1, H4), 0.05)
    w3 = nrm(ks[7], (H4, 2), 0.1)
    b3 = nrm(ks[8], (1, 2), 0.05)
    return (emb_table, w1, b1, w2, b2, wr, br, w3, b3)


if __name__ == "__main__":
    vocab_size = 50
    embed_size = 64
    num_hiddens = 32          # 4 * num_hiddens = 128
    batch, seq = 8, 8

    key = jax.random.PRNGKey(0)
    k_inp, k_par = jax.random.split(key)
    inputs = jax.random.randint(k_inp, (batch, seq), 0, vocab_size, dtype=jnp.int32)
    params = make_params(k_par, vocab_size, embed_size, num_hiddens)

    outs, num_spikes, num_sops = jax.jit(srnn_forward)(inputs, params)
    jax.block_until_ready((outs, num_spikes, num_sops))

    assert outs.shape == (batch, 2)
    assert num_spikes.shape == ()
    assert num_sops.shape == (1,)
    print("KERNEL_OK")
</pallas_src>

<mosaic_0001>
module attributes {stable_mosaic.version = 11 : i64} {
  func.func @ff_kernel(%arg0: i32, %arg1: memref<64x128xbf16, #tpu.memory_space<vmem>>, %arg2: memref<128x128xbf16, #tpu.memory_space<vmem>>, %arg3: memref<1x128xf32, #tpu.memory_space<vmem>>, %arg4: memref<128x128xbf16, #tpu.memory_space<vmem>>, %arg5: memref<1x128xf32, #tpu.memory_space<vmem>>, %arg6: memref<64x128xbf16, #tpu.memory_space<vmem>>) attributes {dimension_semantics = [#tpu.dimension_semantics<parallel>], iteration_bounds = array<i64: 1>, scalar_prefetch = 0 : i64, scratch_operands = 0 : i64, tpu.core_type = #tpu.core_type<tc>, window_params = [{transform_indices = @transform_0, window_bounds = array<i64: 64, 128>}, {pipeline_mode = #tpu.pipeline_mode<synchronous>, transform_indices = @transform_1, window_bounds = array<i64: 128, 128>}, {pipeline_mode = #tpu.pipeline_mode<synchronous>, transform_indices = @transform_2, window_bounds = array<i64: 1, 128>}, {pipeline_mode = #tpu.pipeline_mode<synchronous>, transform_indices = @transform_3, window_bounds = array<i64: 128, 128>}, {pipeline_mode = #tpu.pipeline_mode<synchronous>, transform_indices = @transform_4, window_bounds = array<i64: 1, 128>}, {transform_indices = @transform_5, window_bounds = array<i64: 64, 128>}]} {
    %c0 = arith.constant 0 : index
    %c0_0 = arith.constant 0 : index
    %0 = vector.load %arg1[%c0, %c0_0] : memref<64x128xbf16, #tpu.memory_space<vmem>>, vector<64x128xbf16>
    %c0_1 = arith.constant 0 : index
    %c0_2 = arith.constant 0 : index
    %1 = vector.load %arg2[%c0_1, %c0_2] : memref<128x128xbf16, #tpu.memory_space<vmem>>, vector<128x128xbf16>
    %cst = arith.constant dense<0.000000e+00> : vector<64x128xf32>
    %2 = tpu.matmul %0, %1, %cst {dimension_numbers = #tpu.dot_dimension_numbers<[1], [0], [0], [1], [0, 0, 1, 1], [], []>} : vector<64x128xbf16>, vector<128x128xbf16>, vector<64x128xf32> -> vector<64x128xf32>
    %c0_3 = arith.constant 0 : index
    %c0_4 = arith.constant 0 : index
    %3 = vector.load %arg3[%c0_3, %c0_4] : memref<1x128xf32, #tpu.memory_space<vmem>>, vector<1x128xf32>
    %4 = vector.broadcast %3 : vector<1x128xf32> to vector<64x128xf32>
    %5 = arith.addf %2, %4 : vector<64x128xf32>
    %cst_5 = arith.constant 0.000000e+00 : f32
    %6 = vector.broadcast %cst_5 : f32 to vector<64x128xf32>
    %7 = arith.maximumf %5, %6 : vector<64x128xf32>
    %cst_6 = arith.constant 1.600000e+01 : f32
    %8 = vector.broadcast %cst_6 : f32 to vector<64x128xf32>
    %9 = arith.mulf %7, %8 : vector<64x128xf32>
    %10 = math.roundeven %9 : vector<64x128xf32>
    %cst_7 = arith.constant 6.250000e-02 : f32
    %11 = vector.broadcast %cst_7 : f32 to vector<64x128xf32>
    %12 = arith.mulf %10, %11 : vector<64x128xf32>
    %13 = arith.truncf %12 : vector<64x128xf32> to vector<64x128xbf16>
    %c0_8 = arith.constant 0 : index
    %c0_9 = arith.constant 0 : index
    %14 = vector.load %arg4[%c0_8, %c0_9] : memref<128x128xbf16, #tpu.memory_space<vmem>>, vector<128x128xbf16>
    %cst_10 = arith.constant dense<0.000000e+00> : vector<64x128xf32>
    %15 = tpu.matmul %13, %14, %cst_10 {dimension_numbers = #tpu.dot_dimension_numbers<[1], [0], [0], [1], [0, 0, 1, 1], [], []>} : vector<64x128xbf16>, vector<128x128xbf16>, vector<64x128xf32> -> vector<64x128xf32>
    %c0_11 = arith.constant 0 : index
    %c0_12 = arith.constant 0 : index
    %16 = vector.load %arg5[%c0_11, %c0_12] : memref<1x128xf32, #tpu.memory_space<vmem>>, vector<1x128xf32>
    %17 = vector.broadcast %16 : vector<1x128xf32> to vector<64x128xf32>
    %18 = arith.addf %15, %17 : vector<64x128xf32>
    %19 = arith.truncf %18 : vector<64x128xf32> to vector<64x128xbf16>
    %c0_13 = arith.constant 0 : index
    %c0_14 = arith.constant 0 : index
    %20 = vector.load %arg6[%c0_13, %c0_14] : memref<64x128xbf16, #tpu.memory_space<vmem>>, vector<64x128xbf16>
    tpu.vector_store %arg6[%c0_13, %c0_14], %19 {strides = array<i32>} : memref<64x128xbf16, #tpu.memory_space<vmem>>, vector<64x128xbf16>,
    return
  }
  func.func @transform_0(%arg0: i32) -> (i32, i32) {
    %c0_i32 = arith.constant 0 : i32
    %c0_i32_0 = arith.constant 0 : i32
    return %arg0, %c0_i32 : i32, i32
  }
  func.func @transform_1(%arg0: i32) -> (i32, i32) {
    %c0_i32 = arith.constant 0 : i32
    %c0_i32_0 = arith.constant 0 : i32
    %c0_i32_1 = arith.constant 0 : i32
    return %c0_i32, %c0_i32_0 : i32, i32
  }
  func.func @transform_2(%arg0: i32) -> (i32, i32) {
    %c0_i32 = arith.constant 0 : i32
    %c0_i32_0 = arith.constant 0 : i32
    %c0_i32_1 = arith.constant 0 : i32
    return %c0_i32, %c0_i32_0 : i32, i32
  }
  func.func @transform_3(%arg0: i32) -> (i32, i32) {
    %c0_i32 = arith.constant 0 : i32
    %c0_i32_0 = arith.constant 0 : i32
    %c0_i32_1 = arith.constant 0 : i32
    return %c0_i32, %c0_i32_0 : i32, i32
  }
  func.func @transform_4(%arg0: i32) -> (i32, i32) {
    %c0_i32 = arith.constant 0 : i32
    %c0_i32_0 = arith.constant 0 : i32
    %c0_i32_1 = arith.constant 0 : i32
    return %c0_i32, %c0_i32_0 : i32, i32
  }
  func.func @transform_5(%arg0: i32) -> (i32, i32) {
    %c0_i32 = arith.constant 0 : i32
    %c0_i32_0 = arith.constant 0 : i32
    return %arg0, %c0_i32 : i32, i32
  }
}

module attributes {stable_mosaic.version = 11 : i64} {
  func.func @kernel(%arg0: i32, %arg1: i32, %arg2: memref<8x8x128xbf16, #tpu.memory_space<vmem>>, %arg3: memref<128x128xbf16, #tpu.memory_space<vmem>>, %arg4: memref<8x128xf32, #tpu.memory_space<vmem>>, %arg5: memref<8x128xf32, #tpu.memory_space<vmem>>, %arg6: memref<8x128xbf16, #tpu.memory_space<vmem>>) attributes {dimension_semantics = [#tpu.dimension_semantics<parallel>, #tpu.dimension_semantics<arbitrary>], iteration_bounds = array<i64: 1, 1>, scalar_prefetch = 0 : i64, scratch_operands = 2 : i64, tpu.core_type = #tpu.core_type<tc>, window_params = [{transform_indices = @transform_0, window_bounds = array<i64: 8, 8, 128>}, {pipeline_mode = #tpu.pipeline_mode<synchronous>, transform_indices = @transform_1, window_bounds = array<i64: 128, 128>}, {transform_indices = @transform_2, window_bounds = array<i64: 8, 128>}]} {
    %c0_i32 = arith.constant 0 : i32
    %0 = arith.cmpi eq, %arg1, %c0_i32 : i32
    %1 = arith.extui %0 : i1 to i32
    %c0_i32_0 = arith.constant 0 : i32
    %2 = arith.cmpi ne, %1, %c0_i32_0 : i32
    scf.if %2 {
      %cst_160 = arith.constant 0.000000e+00 : f32
      %227 = vector.broadcast %cst_160 : f32 to vector<8x128xf32>
      %c0_161 = arith.constant 0 : index
      %c0_162 = arith.constant 0 : index
      %228 = vector.load %arg5[%c0_161, %c0_162] : memref<8x128xf32, #tpu.memory_space<vmem>>, vector<8x128xf32>
      tpu.vector_store %arg5[%c0_161, %c0_162], %227 {strides = array<i32>} : memref<8x128xf32, #tpu.memory_space<vmem>>, vector<8x128xf32>,
      %cst_163 = arith.constant 0.000000e+00 : bf16
      %229 = vector.broadcast %cst_163 : bf16 to vector<8x128xbf16>
      %c0_164 = arith.constant 0 : index
      %c0_165 = arith.constant 0 : index
      %230 = vector.load %arg6[%c0_164, %c0_165] : memref<8x128xbf16, #tpu.memory_space<vmem>>, vector<8x128xbf16>
      tpu.vector_store %arg6[%c0_164, %c0_165], %229 {strides = array<i32>} : memref<8x128xbf16, #tpu.memory_space<vmem>>, vector<8x128xbf16>,
      %cst_166 = arith.constant 0.000000e+00 : f32
      %231 = vector.broadcast %cst_166 : f32 to vector<8x128xf32>
      %c0_167 = arith.constant 0 : index
      %c0_168 = arith.constant 0 : index
      %232 = vector.load %arg4[%c0_167, %c0_168] : memref<8x128xf32, #tpu.memory_space<vmem>>, vector<8x128xf32>
      tpu.vector_store %arg4[%c0_167, %c0_168], %231 {strides = array<i32>} : memref<8x128xf32, #tpu.memory_space<vmem>>, vector<8x128xf32>,
    } else {
    }
    %c0_i32_1 = arith.constant 0 : i32
    %c0 = arith.constant 0 : index
    %c0_2 = arith.constant 0 : index
    %3 = vector.load %arg6[%c0, %c0_2] : memref<8x128xbf16, #tpu.memory_space<vmem>>, vector<8x128xbf16>
    %c0_3 = arith.constant 0 : index
    %c0_4 = arith.constant 0 : index
    %4 = vector.load %arg5[%c0_3, %c0_4] : memref<8x128xf32, #tpu.memory_space<vmem>>, vector<8x128xf32>
    %5 = arith.extf %3 : vector<8x128xbf16> to vector<8x128xf32>
    %cst = arith.constant 1.000000e+00 : f32
    %6 = vector.broadcast %cst : f32 to vector<8x128xf32>
    %7 = arith.subf %6, %5 : vector<8x128xf32>
    %cst_5 = arith.constant 2.000000e-01 : f32
    %8 = vector.broadcast %cst_5 : f32 to vector<8x128xf32>
    %9 = arith.mulf %8, %7 : vector<8x128xf32>
    %10 = arith.mulf %4, %9 : vector<8x128xf32>
    %c0_6 = arith.constant 0 : index
    %c0_7 = arith.constant 0 : index
    %11 = vector.load %arg3[%c0_6, %c0_7] : memref<128x128xbf16, #tpu.memory_space<vmem>>, vector<128x128xbf16>
    %cst_8 = arith.constant dense<0.000000e+00> : vector<8x128xf32>
    %12 = tpu.matmul %3, %11, %cst_8 {dimension_numbers = #tpu.dot_dimension_numbers<[1], [0], [0], [1], [0, 0, 1, 1], [], []>} : vector<8x128xbf16>, vector<128x128xbf16>, vector<8x128xf32> -> vector<8x128xf32>
    %13 = arith.index_cast %c0_i32_1 : i32 to index
    %c0_9 = arith.constant 0 : index
    %c0_10 = arith.constant 0 : index
    %14 = vector.load %arg2[%13, %c0_9, %c0_10] : memref<8x8x128xbf16, #tpu.memory_space<vmem>>, vector<1x8x128xbf16>
    %15 = vector.shape_cast %14 : vector<1x8x128xbf16> to vector<8x128xbf16>
    %16 = arith.extf %15 : vector<8x128xbf16> to vector<8x128xf32>
    %17 = arith.addf %10, %16 : vector<8x128xf32>
    %18 = arith.addf %17, %12 : vector<8x128xf32>
    %cst_11 = arith.constant 5.000000e-01 : f32
    %19 = vector.broadcast %cst_11 : f32 to vector<8x128xf32>
    %20 = arith.cmpf ogt, %18, %19 : vector<8x128xf32>
    %c0_12 = arith.constant 0 : index
    %c0_13 = arith.constant 0 : index
    %21 = vector.load %arg5[%c0_12, %c0_13] : memref<8x128xf32, #tpu.memory_space<vmem>>, vector<8x128xf32>
    tpu.vector_store %arg5[%c0_12, %c0_13], %18 {strides = array<i32>} : memref<8x128xf32, #tpu.memory_space<vmem>>, vector<8x128xf32>,
    %22 = arith.extui %20 : vector<8x128xi1> to vector<8x128xi32>
    %23 = arith.sitofp %22 : vector<8x128xi32> to vector<8x128xf32>
    %24 = arith.truncf %23 : vector<8x128xf32> to vector<8x128xbf16>
    %c0_14 = arith.constant 0 : index
    %c0_15 = arith.constant 0 : index
    %25 = vector.load %arg6[%c0_14, %c0_15] : memref<8x128xbf16, #tpu.memory_space<vmem>>, vector<8x128xbf16>
    tpu.vector_store %arg6[%c0_14, %c0_15], %24 {strides = array<i32>} : memref<8x128xbf16, #tpu.memory_space<vmem>>, vector<8x128xbf16>,
    %c0_16 = arith.constant 0 : index
    %c0_17 = arith.constant 0 : index
    %26 = vector.load %arg4[%c0_16, %c0_17] : memref<8x128xf32, #tpu.memory_space<vmem>>, vector<8x128xf32>
    %27 = arith.extui %20 : vector<8x128xi1> to vector<8x128xi32>
    %28 = arith.sitofp %27 : vector<8x128xi32> to vector<8x128xf32>
    %29 = arith.addf %26, %28 : vector<8x128xf32>
    %c0_18 = arith.constant 0 : index
    %c0_19 = arith.constant 0 : index
    %30 = vector.load %arg4[%c0_18, %c0_19] : memref<8x128xf32, #tpu.memory_space<vmem>>, vector<8x128xf32>
    tpu.vector_store %arg4[%c0_18, %c0_19], %29 {strides = array<i32>} : memref<8x128xf32, #tpu.memory_space<vmem>>, vector<8x128xf32>,
    %c1_i32 = arith.constant 1 : i32
    %c0_20 = arith.constant 0 : index
    %c0_21 = arith.constant 0 : index
    %31 = vector.load %arg6[%c0_20, %c0_21] : memref<8x128xbf16, #tpu.memory_space<vmem>>, vector<8x128xbf16>
    %c0_22 = arith.constant 0 : index
    %c0_23 = arith.constant 0 : index
    %32 = vector.load %arg5[%c0_22, %c0_23] : memref<8x128xf32, #tpu.memory_space<vmem>>, vector<8x128xf32>
    %33 = arith.extf %31 : vector<8x128xbf16> to vector<8x128xf32>
    %cst_24 = arith.constant 1.000000e+00 : f32
    %34 = vector.broadcast %cst_24 : f32 to vector<8x128xf32>
    %35 = arith.subf %34, %33 : vector<8x128xf32>
    %cst_25 = arith.constant 2.000000e-01 : f32
    %36 = vector.broadcast %cst_25 : f32 to vector<8x128xf32>
    %37 = arith.mulf %36, %35 : vector<8x128xf32>
    %38 = arith.mulf %32, %37 : vector<8x128xf32>
    %c0_26 = arith.constant 0 : index
    %c0_27 = arith.constant 0 : index
    %39 = vector.load %arg3[%c0_26, %c0_27] : memref<128x128xbf16, #tpu.memory_space<vmem>>, vector<128x128xbf16>
    %cst_28 = arith.constant dense<0.000000e+00> : vector<8x128xf32>
    %40 = tpu.matmul %31, %39, %cst_28 {dimension_numbers = #tpu.dot_dimension_numbers<[1], [0], [0], [1], [0, 0, 1, 1], [], []>} : vector<8x128xbf16>, vector<128x128xbf16>, vector<8x128xf32> -> vector<8x128xf32>
    %41 = arith.index_cast %c1_i32 : i32 to index
    %c0_29 = arith.constant 0 : index
    %c0_30 = arith.constant 0 : index
    %42 = vector.load %arg2[%41, %c0_29, %c0_30] : memref<8x8x128xbf16, #tpu.memory_space<vmem>>, vector<1x8x128xbf16>
    %43 = vector.shape_cast %42 : vector<1x8x128xbf16> to vector<8x128xbf16>
    %44 = arith.extf %43 : vector<8x128xbf16> to vector<8x128xf32>
    %45 = arith.addf %38, %44 : vector<8x128xf32>
    %46 = arith.addf %45, %40 : vector<8x128xf32>
    %cst_31 = arith.constant 5.000000e-01 : f32
    %47 = vector.broadcast %cst_31 : f32 to vector<8x128xf32>
    %48 = arith.cmpf ogt, %46, %47 : vector<8x128xf32>
    %c0_32 = arith.constant 0 : index
    %c0_33 = arith.constant 0 : index
    %49 = vector.load %arg5[%c0_32, %c0_33] : memref<8x128xf32, #tpu.memory_space<vmem>>, vector<8x128xf32>
    tpu.vector_store %arg5[%c0_32, %c0_33], %46 {strides = array<i32>} : memref<8x128xf32, #tpu.memory_space<vmem>>, vector<8x128xf32>,
    %50 = arith.extui %48 : vector<8x128xi1> to vector<8x128xi32>
    %51 = arith.sitofp %50 : vector<8x128xi32> to vector<8x128xf32>
    %52 = arith.truncf %51 : vector<8x128xf32> to vector<8x128xbf16>
    %c0_34 = arith.constant 0 : index
    %c0_35 = arith.constant 0 : index
    %53 = vector.load %arg6[%c0_34, %c0_35] : memref<8x128xbf16, #tpu.memory_space<vmem>>, vector<8x128xbf16>
    tpu.vector_store %arg6[%c0_34, %c0_35], %52 {strides = array<i32>} : memref<8x128xbf16, #tpu.memory_space<vmem>>, vector<8x128xbf16>,
    %c0_36 = arith.constant 0 : index
    %c0_37 = arith.constant 0 : index
    %54 = vector.load %arg4[%c0_36, %c0_37] : memref<8x128xf32, #tpu.memory_space<vmem>>, vector<8x128xf32>
    %55 = arith.extui %48 : vector<8x128xi1> to vector<8x128xi32>
    %56 = arith.sitofp %55 : vector<8x128xi32> to vector<8x128xf32>
    %57 = arith.addf %54, %56 : vector<8x128xf32>
    %c0_38 = arith.constant 0 : index
    %c0_39 = arith.constant 0 : index
    %58 = vector.load %arg4[%c0_38, %c0_39] : memref<8x128xf32, #tpu.memory_space<vmem>>, vector<8x128xf32>
    tpu.vector_store %arg4[%c0_38, %c0_39], %57 {strides = array<i32>} : memref<8x128xf32, #tpu.memory_space<vmem>>, vector<8x128xf32>,
    %c2_i32 = arith.constant 2 : i32
    %c0_40 = arith.constant 0 : index
    %c0_41 = arith.constant 0 : index
    %59 = vector.load %arg6[%c0_40, %c0_41] : memref<8x128xbf16, #tpu.memory_space<vmem>>, vector<8x128xbf16>
    %c0_42 = arith.constant 0 : index
    %c0_43 = arith.constant 0 : index
    %60 = vector.load %arg5[%c0_42, %c0_43] : memref<8x128xf32, #tpu.memory_space<vmem>>, vector<8x128xf32>
    %61 = arith.extf %59 : vector<8x128xbf16> to vector<8x128xf32>
    %cst_44 = arith.constant 1.000000e+00 : f32
    %62 = vector.broadcast %cst_44 : f32 to vector<8x128xf32>
    %63 = arith.subf %62, %61 : vector<8x128xf32>
    %cst_45 = arith.constant 2.000000e-01 : f32
    %64 = vector.broadcast %cst_45 : f32 to vector<8x128xf32>
    %65 = arith.mulf %64, %63 : vector<8x128xf32>
    %66 = arith.mulf %60, %65 : vector<8x128xf32>
    %c0_46 = arith.constant 0 : index
    %c0_47 = arith.constant 0 : index
    %67 = vector.load %arg3[%c0_46, %c0_47] : memref<128x128xbf16, #tpu.memory_space<vmem>>, vector<128x128xbf16>
    %cst_48 = arith.constant dense<0.000000e+00> : vector<8x128xf32>
    %68 = tpu.matmul %59, %67, %cst_48 {dimension_numbers = #tpu.dot_dimension_numbers<[1], [0], [0], [1], [0, 0, 1, 1], [], []>} : vector<8x128xbf16>, vector<128x128xbf16>, vector<8x128xf32> -> vector<8x128xf32>
    %69 = arith.index_cast %c2_i32 : i32 to index
    %c0_49 = arith.constant 0 : index
    %c0_50 = arith.constant 0 : index
    %70 = vector.load %arg2[%69, %c0_49, %c0_50] : memref<8x8x128xbf16, #tpu.memory_space<vmem>>, vector<1x8x128xbf16>
    %71 = vector.shape_cast %70 : vector<1x8x128xbf16> to vector<8x128xbf16>
    %72 = arith.extf %71 : vector<8x128xbf16> to vector<8x128xf32>
    %73 = arith.addf %66, %72 : vector<8x128xf32>
    %74 = arith.addf %73, %68 : vector<8x128xf32>
    %cst_51 = arith.constant 5.000000e-01 : f32
    %75 = vector.broadcast %cst_51 : f32 to vector<8x128xf32>
    %76 = arith.cmpf ogt, %74, %75 : vector<8x128xf32>
    %c0_52 = arith.constant 0 : index
    %c0_53 = arith.constant 0 : index
    %77 = vector.load %arg5[%c0_52, %c0_53] : memref<8x128xf32, #tpu.memory_space<vmem>>, vector<8x128xf32>
    tpu.vector_store %arg5[%c0_52, %c0_53], %74 {strides = array<i32>} : memref<8x128xf32, #tpu.memory_space<vmem>>, vector<8x128xf32>,
    %78 = arith.extui %76 : vector<8x128xi1> to vector<8x128xi32>
    %79 = arith.sitofp %78 : vector<8x128xi32> to vector<8x128xf32>
    %80 = arith.truncf %79 : vector<8x128xf32> to vector<8x128xbf16>
    %c0_54 = arith.constant 0 : index
    %c0_55 = arith.constant 0 : index
    %81 = vector.load %arg6[%c0_54, %c0_55] : memref<8x128xbf16, #tpu.memory_space<vmem>>, vector<8x128xbf16>
    tpu.vector_store %arg6[%c0_54, %c0_55], %80 {strides = array<i32>} : memref<8x128xbf16, #tpu.memory_space<vmem>>, vector<8x128xbf16>,
    %c0_56 = arith.constant 0 : index
    %c0_57 = arith.constant 0 : index
    %82 = vector.load %arg4[%c0_56, %c0_57] : memref<8x128xf32, #tpu.memory_space<vmem>>, vector<8x128xf32>
    %83 = arith.extui %76 : vector<8x128xi1> to vector<8x128xi32>
    %84 = arith.sitofp %83 : vector<8x128xi32> to vector<8x128xf32>
    %85 = arith.addf %82, %84 : vector<8x128xf32>
    %c0_58 = arith.constant 0 : index
    %c0_59 = arith.constant 0 : index
    %86 = vector.load %arg4[%c0_58, %c0_59] : memref<8x128xf32, #tpu.memory_space<vmem>>, vector<8x128xf32>
    tpu.vector_store %arg4[%c0_58, %c0_59], %85 {strides = array<i32>} : memref<8x128xf32, #tpu.memory_space<vmem>>, vector<8x128xf32>,
    %c3_i32 = arith.constant 3 : i32
    %c0_60 = arith.constant 0 : index
    %c0_61 = arith.constant 0 : index
    %87 = vector.load %arg6[%c0_60, %c0_61] : memref<8x128xbf16, #tpu.memory_space<vmem>>, vector<8x128xbf16>
    %c0_62 = arith.constant 0 : index
    %c0_63 = arith.constant 0 : index
    %88 = vector.load %arg5[%c0_62, %c0_63] : memref<8x128xf32, #tpu.memory_space<vmem>>, vector<8x128xf32>
    %89 = arith.extf %87 : vector<8x128xbf16> to vector<8x128xf32>
    %cst_64 = arith.constant 1.000000e+00 : f32
    %90 = vector.broadcast %cst_64 : f32 to vector<8x128xf32>
    %91 = arith.subf %90, %89 : vector<8x128xf32>
    %cst_65 = arith.constant 2.000000e-01 : f32
    %92 = vector.broadcast %cst_65 : f32 to vector<8x128xf32>
    %93 = arith.mulf %92, %91 : vector<8x128xf32>
    %94 = arith.mulf %88, %93 : vector<8x128xf32>
    %c0_66 = arith.constant 0 : index
    %c0_67 = arith.constant 0 : index
    %95 = vector.load %arg3[%c0_66, %c0_67] : memref<128x128xbf16, #tpu.memory_space<vmem>>, vector<128x128xbf16>
    %cst_68 = arith.constant dense<0.000000e+00> : vector<8x128xf32>
    %96 = tpu.matmul %87, %95, %cst_68 {dimension_numbers = #tpu.dot_dimension_numbers<[1], [0], [0], [1], [0, 0, 1, 1], [], []>} : vector<8x128xbf16>, vector<128x128xbf16>, vector<8x128xf32> -> vector<8x128xf32>
    %97 = arith.index_cast %c3_i32 : i32 to index
    %c0_69 = arith.constant 0 : index
    %c0_70 = arith.constant 0 : index
    %98 = vector.load %arg2[%97, %c0_69, %c0_70] : memref<8x8x128xbf16, #tpu.memory_space<vmem>>, vector<1x8x128xbf16>
    %99 = vector.shape_cast %98 : vector<1x8x128xbf16> to vector<8x128xbf16>
    %100 = arith.extf %99 : vector<8x128xbf16> to vector<8x128xf32>
    %101 = arith.addf %94, %100 : vector<8x128xf32>
    %102 = arith.addf %101, %96 : vector<8x128xf32>
    %cst_71 = arith.constant 5.000000e-01 : f32
    %103 = vector.broadcast %cst_71 : f32 to vector<8x128xf32>
    %104 = arith.cmpf ogt, %102, %103 : vector<8x128xf32>
    %c0_72 = arith.constant 0 : index
    %c0_73 = arith.constant 0 : index
    %105 = vector.load %arg5[%c0_72, %c0_73] : memref<8x128xf32, #tpu.memory_space<vmem>>, vector<8x128xf32>
    tpu.vector_store %arg5[%c0_72, %c0_73], %102 {strides = array<i32>} : memref<8x128xf32, #tpu.memory_space<vmem>>, vector<8x128xf32>,
    %106 = arith.extui %104 : vector<8x128xi1> to vector<8x128xi32>
    %107 = arith.sitofp %106 : vector<8x128xi32> to vector<8x128xf32>
    %108 = arith.truncf %107 : vector<8x128xf32> to vector<8x128xbf16>
    %c0_74 = arith.constant 0 : index
    %c0_75 = arith.constant 0 : index
    %109 = vector.load %arg6[%c0_74, %c0_75] : memref<8x128xbf16, #tpu.memory_space<vmem>>, vector<8x128xbf16>
    tpu.vector_store %arg6[%c0_74, %c0_75], %108 {strides = array<i32>} : memref<8x128xbf16, #tpu.memory_space<vmem>>, vector<8x128xbf16>,
    %c0_76 = arith.constant 0 : index
    %c0_77 = arith.constant 0 : index
    %110 = vector.load %arg4[%c0_76, %c0_77] : memref<8x128xf32, #tpu.memory_space<vmem>>, vector<8x128xf32>
    %111 = arith.extui %104 : vector<8x128xi1> to vector<8x128xi32>
    %112 = arith.sitofp %111 : vector<8x128xi32> to vector<8x128xf32>
    %113 = arith.addf %110, %112 : vector<8x128xf32>
    %c0_78 = arith.constant 0 : index
    %c0_79 = arith.constant 0 : index
    %114 = vector.load %arg4[%c0_78, %c0_79] : memref<8x128xf32, #tpu.memory_space<vmem>>, vector<8x128xf32>
    tpu.vector_store %arg4[%c0_78, %c0_79], %113 {strides = array<i32>} : memref<8x128xf32, #tpu.memory_space<vmem>>, vector<8x128xf32>,
    %c4_i32 = arith.constant 4 : i32
    %c0_80 = arith.constant 0 : index
    %c0_81 = arith.constant 0 : index
    %115 = vector.load %arg6[%c0_80, %c0_81] : memref<8x128xbf16, #tpu.memory_space<vmem>>, vector<8x128xbf16>
    %c0_82 = arith.constant 0 : index
    %c0_83 = arith.constant 0 : index
    %116 = vector.load %arg5[%c0_82, %c0_83] : memref<8x128xf32, #tpu.memory_space<vmem>>, vector<8x128xf32>
    %117 = arith.extf %115 : vector<8x128xbf16> to vector<8x128xf32>
    %cst_84 = arith.constant 1.000000e+00 : f32
    %118 = vector.broadcast %cst_84 : f32 to vector<8x128xf32>
    %119 = arith.subf %118, %117 : vector<8x128xf32>
    %cst_85 = arith.constant 2.000000e-01 : f32
    %120 = vector.broadcast %cst_85 : f32 to vector<8x128xf32>
    %121 = arith.mulf %120, %119 : vector<8x128xf32>
    %122 = arith.mulf %116, %121 : vector<8x128xf32>
    %c0_86 = arith.constant 0 : index
    %c0_87 = arith.constant 0 : index
    %123 = vector.load %arg3[%c0_86, %c0_87] : memref<128x128xbf16, #tpu.memory_space<vmem>>, vector<128x128xbf16>
    %cst_88 = arith.constant dense<0.000000e+00> : vector<8x128xf32>
    %124 = tpu.matmul %115, %123, %cst_88 {dimension_numbers = #tpu.dot_dimension_numbers<[1], [0], [0], [1], [0, 0, 1, 1], [], []>} : vector<8x128xbf16>, vector<128x128xbf16>, vector<8x128xf32> -> vector<8x128xf32>
    %125 = arith.index_cast %c4_i32 : i32 to index
    %c0_89 = arith.constant 0 : index
    %c0_90 = arith.constant 0 : index
    %126 = vector.load %arg2[%125, %c0_89, %c0_90] : memref<8x8x128xbf16, #tpu.memory_space<vmem>>, vector<1x8x128xbf16>
    %127 = vector.shape_cast %126 : vector<1x8x128xbf16> to vector<8x128xbf16>
    %128 = arith.extf %127 : vector<8x128xbf16> to vector<8x128xf32>
    %129 = arith.addf %122, %128 : vector<8x128xf32>
    %130 = arith.addf %129, %124 : vector<8x128xf32>
    %cst_91 = arith.constant 5.000000e-01 : f32
    %131 = vector.broadcast %cst_91 : f32 to vector<8x128xf32>
    %132 = arith.cmpf ogt, %130, %131 : vector<8x128xf32>
    %c0_92 = arith.constant 0 : index
    %c0_93 = arith.constant 0 : index
    %133 = vector.load %arg5[%c0_92, %c0_93] : memref<8x128xf32, #tpu.memory_space<vmem>>, vector<8x128xf32>
    tpu.vector_store %arg5[%c0_92, %c0_93], %130 {strides = array<i32>} : memref<8x128xf32, #tpu.memory_space<vmem>>, vector<8x128xf32>,
    %134 = arith.extui %132 : vector<8x128xi1> to vector<8x128xi32>
    %135 = arith.sitofp %134 : vector<8x128xi32> to vector<8x128xf32>
    %136 = arith.truncf %135 : vector<8x128xf32> to vector<8x128xbf16>
    %c0_94 = arith.constant 0 : index
    %c0_95 = arith.constant 0 : index
    %137 = vector.load %arg6[%c0_94, %c0_95] : memref<8x128xbf16, #tpu.memory_space<vmem>>, vector<8x128xbf16>
    tpu.vector_store %arg6[%c0_94, %c0_95], %136 {strides = array<i32>} : memref<8x128xbf16, #tpu.memory_space<vmem>>, vector<8x128xbf16>,
    %c0_96 = arith.constant 0 : index
    %c0_97 = arith.constant 0 : index
    %138 = vector.load %arg4[%c0_96, %c0_97] : memref<8x128xf32, #tpu.memory_space<vmem>>, vector<8x128xf32>
    %139 = arith.extui %132 : vector<8x128xi1> to vector<8x128xi32>
    %140 = arith.sitofp %139 : vector<8x128xi32> to vector<8x128xf32>
    %141 = arith.addf %138, %140 : vector<8x128xf32>
    %c0_98 = arith.constant 0 : index
    %c0_99 = arith.constant 0 : index
    %142 = vector.load %arg4[%c0_98, %c0_99] : memref<8x128xf32, #tpu.memory_space<vmem>>, vector<8x128xf32>
    tpu.vector_store %arg4[%c0_98, %c0_99], %141 {strides = array<i32>} : memref<8x128xf32, #tpu.memory_space<vmem>>, vector<8x128xf32>,
    %c5_i32 = arith.constant 5 : i32
    %c0_100 = arith.constant 0 : index
    %c0_101 = arith.constant 0 : index
    %143 = vector.load %arg6[%c0_100, %c0_101] : memref<8x128xbf16, #tpu.memory_space<vmem>>, vector<8x128xbf16>
    %c0_102 = arith.constant 0 : index
    %c0_103 = arith.constant 0 : index
    %144 = vector.load %arg5[%c0_102, %c0_103] : memref<8x128xf32, #tpu.memory_space<vmem>>, vector<8x128xf32>
    %145 = arith.extf %143 : vector<8x128xbf16> to vector<8x128xf32>
    %cst_104 = arith.constant 1.000000e+00 : f32
    %146 = vector.broadcast %cst_104 : f32 to vector<8x128xf32>
    %147 = arith.subf %146, %145 : vector<8x128xf32>
    %cst_105 = arith.constant 2.000000e-01 : f32
    %148 = vector.broadcast %cst_105 : f32 to vector<8x128xf32>
    %149 = arith.mulf %148, %147 : vector<8x128xf32>
    %150 = arith.mulf %144, %149 : vector<8x128xf32>
    %c0_106 = arith.constant 0 : index
    %c0_107 = arith.constant 0 : index
    %151 = vector.load %arg3[%c0_106, %c0_107] : memref<128x128xbf16, #tpu.memory_space<vmem>>, vector<128x128xbf16>
    %cst_108 = arith.constant dense<0.000000e+00> : vector<8x128xf32>
    %152 = tpu.matmul %143, %151, %cst_108 {dimension_numbers = #tpu.dot_dimension_numbers<[1], [0], [0], [1], [0, 0, 1, 1], [], []>} : vector<8x128xbf16>, vector<128x128xbf16>, vector<8x128xf32> -> vector<8x128xf32>
    %153 = arith.index_cast %c5_i32 : i32 to index
    %c0_109 = arith.constant 0 : index
    %c0_110 = arith.constant 0 : index
    %154 = vector.load %arg2[%153, %c0_109, %c0_110] : memref<8x8x128xbf16, #tpu.memory_space<vmem>>, vector<1x8x128xbf16>
    %155 = vector.shape_cast %154 : vector<1x8x128xbf16> to vector<8x128xbf16>
    %156 = arith.extf %155 : vector<8x128xbf16> to vector<8x128xf32>
    %157 = arith.addf %150, %156 : vector<8x128xf32>
    %158 = arith.addf %157, %152 : vector<8x128xf32>
    %cst_111 = arith.constant 5.000000e-01 : f32
    %159 = vector.broadcast %cst_111 : f32 to vector<8x128xf32>
    %160 = arith.cmpf ogt, %158, %159 : vector<8x128xf32>
    %c0_112 = arith.constant 0 : index
    %c0_113 = arith.constant 0 : index
    %161 = vector.load %arg5[%c0_112, %c0_113] : memref<8x128xf32, #tpu.memory_space<vmem>>, vector<8x128xf32>
    tpu.vector_store %arg5[%c0_112, %c0_113], %158 {strides = array<i32>} : memref<8x128xf32, #tpu.memory_space<vmem>>, vector<8x128xf32>,
    %162 = arith.extui %160 : vector<8x128xi1> to vector<8x128xi32>
    %163 = arith.sitofp %162 : vector<8x128xi32> to vector<8x128xf32>
    %164 = arith.truncf %163 : vector<8x128xf32> to vector<8x128xbf16>
    %c0_114 = arith.constant 0 : index
    %c0_115 = arith.constant 0 : index
    %165 = vector.load %arg6[%c0_114, %c0_115] : memref<8x128xbf16, #tpu.memory_space<vmem>>, vector<8x128xbf16>
    tpu.vector_store %arg6[%c0_114, %c0_115], %164 {strides = array<i32>} : memref<8x128xbf16, #tpu.memory_space<vmem>>, vector<8x128xbf16>,
    %c0_116 = arith.constant 0 : index
    %c0_117 = arith.constant 0 : index
    %166 = vector.load %arg4[%c0_116, %c0_117] : memref<8x128xf32, #tpu.memory_space<vmem>>, vector<8x128xf32>
    %167 = arith.extui %160 : vector<8x128xi1> to vector<8x128xi32>
    %168 = arith.sitofp %167 : vector<8x128xi32> to vector<8x128xf32>
    %169 = arith.addf %166, %168 : vector<8x128xf32>
    %c0_118 = arith.constant 0 : index
    %c0_119 = arith.constant 0 : index
    %170 = vector.load %arg4[%c0_118, %c0_119] : memref<8x128xf32, #tpu.memory_space<vmem>>, vector<8x128xf32>
    tpu.vector_store %arg4[%c0_118, %c0_119], %169 {strides = array<i32>} : memref<8x128xf32, #tpu.memory_space<vmem>>, vector<8x128xf32>,
    %c6_i32 = arith.constant 6 : i32
    %c0_120 = arith.constant 0 : index
    %c0_121 = arith.constant 0 : index
    %171 = vector.load %arg6[%c0_120, %c0_121] : memref<8x128xbf16, #tpu.memory_space<vmem>>, vector<8x128xbf16>
    %c0_122 = arith.constant 0 : index
    %c0_123 = arith.constant 0 : index
    %172 = vector.load %arg5[%c0_122, %c0_123] : memref<8x128xf32, #tpu.memory_space<vmem>>, vector<8x128xf32>
    %173 = arith.extf %171 : vector<8x128xbf16> to vector<8x128xf32>
    %cst_124 = arith.constant 1.000000e+00 : f32
    %174 = vector.broadcast %cst_124 : f32 to vector<8x128xf32>
    %175 = arith.subf %174, %173 : vector<8x128xf32>
    %cst_125 = arith.constant 2.000000e-01 : f32
    %176 = vector.broadcast %cst_125 : f32 to vector<8x128xf32>
    %177 = arith.mulf %176, %175 : vector<8x128xf32>
    %178 = arith.mulf %172, %177 : vector<8x128xf32>
    %c0_126 = arith.constant 0 : index
    %c0_127 = arith.constant 0 : index
    %179 = vector.load %arg3[%c0_126, %c0_127] : memref<128x128xbf16, #tpu.memory_space<vmem>>, vector<128x128xbf16>
    %cst_128 = arith.constant dense<0.000000e+00> : vector<8x128xf32>
    %180 = tpu.matmul %171, %179, %cst_128 {dimension_numbers = #tpu.dot_dimension_numbers<[1], [0], [0], [1], [0, 0, 1, 1], [], []>} : vector<8x128xbf16>, vector<128x128xbf16>, vector<8x128xf32> -> vector<8x128xf32>
    %181 = arith.index_cast %c6_i32 : i32 to index
    %c0_129 = arith.constant 0 : index
    %c0_130 = arith.constant 0 : index
    %182 = vector.load %arg2[%181, %c0_129, %c0_130] : memref<8x8x128xbf16, #tpu.memory_space<vmem>>, vector<1x8x128xbf16>
    %183 = vector.shape_cast %182 : vector<1x8x128xbf16> to vector<8x128xbf16>
    %184 = arith.extf %183 : vector<8x128xbf16> to vector<8x128xf32>
    %185 = arith.addf %178, %184 : vector<8x128xf32>
    %186 = arith.addf %185, %180 : vector<8x128xf32>
    %cst_131 = arith.constant 5.000000e-01 : f32
    %187 = vector.broadcast %cst_131 : f32 to vector<8x128xf32>
    %188 = arith.cmpf ogt, %186, %187 : vector<8x128xf32>
    %c0_132 = arith.constant 0 : index
    %c0_133 = arith.constant 0 : index
    %189 = vector.load %arg5[%c0_132, %c0_133] : memref<8x128xf32, #tpu.memory_space<vmem>>, vector<8x128xf32>
    tpu.vector_store %arg5[%c0_132, %c0_133], %186 {strides = array<i32>} : memref<8x128xf32, #tpu.memory_space<vmem>>, vector<8x128xf32>,
    %190 = arith.extui %188 : vector<8x128xi1> to vector<8x128xi32>
    %191 = arith.sitofp %190 : vector<8x128xi32> to vector<8x128xf32>
    %192 = arith.truncf %191 : vector<8x128xf32> to vector<8x128xbf16>
    %c0_134 = arith.constant 0 : index
    %c0_135 = arith.constant 0 : index
    %193 = vector.load %arg6[%c0_134, %c0_135] : memref<8x128xbf16, #tpu.memory_space<vmem>>, vector<8x128xbf16>
    tpu.vector_store %arg6[%c0_134, %c0_135], %192 {strides = array<i32>} : memref<8x128xbf16, #tpu.memory_space<vmem>>, vector<8x128xbf16>,
    %c0_136 = arith.constant 0 : index
    %c0_137 = arith.constant 0 : index
    %194 = vector.load %arg4[%c0_136, %c0_137] : memref<8x128xf32, #tpu.memory_space<vmem>>, vector<8x128xf32>
    %195 = arith.extui %188 : vector<8x128xi1> to vector<8x128xi32>
    %196 = arith.sitofp %195 : vector<8x128xi32> to vector<8x128xf32>
    %197 = arith.addf %194, %196 : vector<8x128xf32>
    %c0_138 = arith.constant 0 : index
    %c0_139 = arith.constant 0 : index
    %198 = vector.load %arg4[%c0_138, %c0_139] : memref<8x128xf32, #tpu.memory_space<vmem>>, vector<8x128xf32>
    tpu.vector_store %arg4[%c0_138, %c0_139], %197 {strides = array<i32>} : memref<8x128xf32, #tpu.memory_space<vmem>>, vector<8x128xf32>,
    %c7_i32 = arith.constant 7 : i32
    %c0_140 = arith.constant 0 : index
    %c0_141 = arith.constant 0 : index
    %199 = vector.load %arg6[%c0_140, %c0_141] : memref<8x128xbf16, #tpu.memory_space<vmem>>, vector<8x128xbf16>
    %c0_142 = arith.constant 0 : index
    %c0_143 = arith.constant 0 : index
    %200 = vector.load %arg5[%c0_142, %c0_143] : memref<8x128xf32, #tpu.memory_space<vmem>>, vector<8x128xf32>
    %201 = arith.extf %199 : vector<8x128xbf16> to vector<8x128xf32>
    %cst_144 = arith.constant 1.000000e+00 : f32
    %202 = vector.broadcast %cst_144 : f32 to vector<8x128xf32>
    %203 = arith.subf %202, %201 : vector<8x128xf32>
    %cst_145 = arith.constant 2.000000e-01 : f32
    %204 = vector.broadcast %cst_145 : f32 to vector<8x128xf32>
    %205 = arith.mulf %204, %203 : vector<8x128xf32>
    %206 = arith.mulf %200, %205 : vector<8x128xf32>
    %c0_146 = arith.constant 0 : index
    %c0_147 = arith.constant 0 : index
    %207 = vector.load %arg3[%c0_146, %c0_147] : memref<128x128xbf16, #tpu.memory_space<vmem>>, vector<128x128xbf16>
    %cst_148 = arith.constant dense<0.000000e+00> : vector<8x128xf32>
    %208 = tpu.matmul %199, %207, %cst_148 {dimension_numbers = #tpu.dot_dimension_numbers<[1], [0], [0], [1], [0, 0, 1, 1], [], []>} : vector<8x128xbf16>, vector<128x128xbf16>, vector<8x128xf32> -> vector<8x128xf32>
    %209 = arith.index_cast %c7_i32 : i32 to index
    %c0_149 = arith.constant 0 : index
    %c0_150 = arith.constant 0 : index
    %210 = vector.load %arg2[%209, %c0_149, %c0_150] : memref<8x8x128xbf16, #tpu.memory_space<vmem>>, vector<1x8x128xbf16>
    %211 = vector.shape_cast %210 : vector<1x8x128xbf16> to vector<8x128xbf16>
    %212 = arith.extf %211 : vector<8x128xbf16> to vector<8x128xf32>
    %213 = arith.addf %206, %212 : vector<8x128xf32>
    %214 = arith.addf %213, %208 : vector<8x128xf32>
    %cst_151 = arith.constant 5.000000e-01 : f32
    %215 = vector.broadcast %cst_151 : f32 to vector<8x128xf32>
    %216 = arith.cmpf ogt, %214, %215 : vector<8x128xf32>
    %c0_152 = arith.constant 0 : index
    %c0_153 = arith.constant 0 : index
    %217 = vector.load %arg5[%c0_152, %c0_153] : memref<8x128xf32, #tpu.memory_space<vmem>>, vector<8x128xf32>
    tpu.vector_store %arg5[%c0_152, %c0_153], %214 {strides = array<i32>} : memref<8x128xf32, #tpu.memory_space<vmem>>, vector<8x128xf32>,
    %218 = arith.extui %216 : vector<8x128xi1> to vector<8x128xi32>
    %219 = arith.sitofp %218 : vector<8x128xi32> to vector<8x128xf32>
    %220 = arith.truncf %219 : vector<8x128xf32> to vector<8x128xbf16>
    %c0_154 = arith.constant 0 : index
    %c0_155 = arith.constant 0 : index
    %221 = vector.load %arg6[%c0_154, %c0_155] : memref<8x128xbf16, #tpu.memory_space<vmem>>, vector<8x128xbf16>
    tpu.vector_store %arg6[%c0_154, %c0_155], %220 {strides = array<i32>} : memref<8x128xbf16, #tpu.memory_space<vmem>>, vector<8x128xbf16>,
    %c0_156 = arith.constant 0 : index
    %c0_157 = arith.constant 0 : index
    %222 = vector.load %arg4[%c0_156, %c0_157] : memref<8x128xf32, #tpu.memory_space<vmem>>, vector<8x128xf32>
    %223 = arith.extui %216 : vector<8x128xi1> to vector<8x128xi32>
    %224 = arith.sitofp %223 : vector<8x128xi32> to vector<8x128xf32>
    %225 = arith.addf %222, %224 : vector<8x128xf32>
    %c0_158 = arith.constant 0 : index
    %c0_159 = arith.constant 0 : index
    %226 = vector.load %arg4[%c0_158, %c0_159] : memref<8x128xf32, #tpu.memory_space<vmem>>, vector<8x128xf32>
    tpu.vector_store %arg4[%c0_158, %c0_159], %225 {strides = array<i32>} : memref<8x128xf32, #tpu.memory_space<vmem>>, vector<8x128xf32>,
    %c8_i32 = arith.constant 8 : i32
    return
  }
  func.func @transform_0(%arg0: i32, %arg1: i32) -> (i32, i32, i32) {
    %c0_i32 = arith.constant 0 : i32
    %c0_i32_0 = arith.constant 0 : i32
    return %arg1, %arg0, %c0_i32 : i32, i32, i32
  }
  func.func @transform_1(%arg0: i32, %arg1: i32) -> (i32, i32) {
    %c0_i32 = arith.constant 0 : i32
    %c0_i32_0 = arith.constant 0 : i32
    %c0_i32_1 = arith.constant 0 : i32
    return %c0_i32, %c0_i32_0 : i32, i32
  }
  func.func @transform_2(%arg0: i32, %arg1: i32) -> (i32, i32) {
    %c0_i32 = arith.constant 0 : i32
    %c0_i32_0 = arith.constant 0 : i32
    return %arg0, %c0_i32 : i32, i32
  }
}

</mosaic_0001>

<llo_original>
// kernel: srnn_forward.2
$region0: #{srnn_forward.2}
  #allocation0 [shape = 'u32[]', space=smem, size = 0x4, offset = 0x4, fixed_abs, tag = 'smem constant byte address 0x4 - core index']
  #allocation1 [shape = 'u32[144,128]{1,0:T(1,128)}', space=vmem, size = 0x12000, scoped, tag = 'internal scratch']
  %s0 = inlined_call_operand.vmem [shape: bf16[64,128], index: 0, kind: input, shape index: {}]
  %s1 = inlined_call_operand.vmem [shape: bf16[128,128], index: 1, kind: input, shape index: {}]
  %s2 = inlined_call_operand.vmem [shape: f32[1,128], index: 2, kind: input, shape index: {}]
  %s3 = inlined_call_operand.vmem [shape: bf16[128,128], index: 3, kind: input, shape index: {}]
  %s4 = inlined_call_operand.vmem [shape: f32[1,128], index: 4, kind: input, shape index: {}]
  %s5 = inlined_call_operand.vmem [shape: bf16[64,128], index: 5, kind: output, shape index: {}]
  %s6 = sld [smem:[#allocation0]]
  $region30: #{srnn_forward.2} parent=0
    _
  %s8 = ssub.s32 1, %s6
  %s9 = scalar_select 0, %s8, %s6
  // Predicated region
  $region2: #{srnn_forward.2} parent=0 // pred_check
    _
  $region3: #{srnn_forward.2} parent=0 // pred_check_branch
    %11 = sbr.rel (0) target = $region5
  $region4: #{srnn_forward.2} parent=0 // pred_region
    _
  $region5: #{srnn_forward.2} parent=0 // pred_fallthru
    _
  // Predicated region
  $region6: #{srnn_forward.2} parent=0 // pred_check
    _
  $region7: #{srnn_forward.2} parent=0 // pred_check_branch
    %13 = sbr.rel (0) target = $region9
  $region8: #{srnn_forward.2} parent=0 // pred_region
    _
  $region9: #{srnn_forward.2} parent=0 // pred_fallthru
    _
  // Predicated region
  $region10: #{srnn_forward.2} parent=0 // pred_check
    _
  $region11: #{srnn_forward.2} parent=0 // pred_check_branch
    %15 = sbr.rel (0) target = $region13
  $region12: #{srnn_forward.2} parent=0 // pred_region
    _
  $region13: #{srnn_forward.2} parent=0 // pred_fallthru
    _
  // Predicated region
  $region14: #{srnn_forward.2} parent=0 // pred_check
    _
  $region15: #{srnn_forward.2} parent=0 // pred_check_branch
    %17 = sbr.rel (0) target = $region17
  $region16: #{srnn_forward.2} parent=0 // pred_region
    _
  $region17: #{srnn_forward.2} parent=0 // pred_fallthru
    _
  // Predicated region
  $region18: #{srnn_forward.2} parent=0 // pred_check
    _
  $region19: #{srnn_forward.2} parent=0 // pred_check_branch
    %19 = sbr.rel (0) target = $region21
  $region20: #{srnn_forward.2} parent=0 // pred_region
    _
  $region21: #{srnn_forward.2} parent=0 // pred_fallthru
    _
  %v21 = vld [vmem:[%s0] sm:$0xf]
  %v22 = vld [vmem:[%s0 + $0x4] sm:$0xf]
  %v23 = vld [vmem:[%s0 + $0x8] sm:$0xf]
  %v24 = vld [vmem:[%s0 + $0xc] sm:$0xf]
  %v25 = vld [vmem:[%s0 + $0x10] sm:$0xf]
  %v26 = vld [vmem:[%s0 + $0x14] sm:$0xf]
  %v27 = vld [vmem:[%s0 + $0x18] sm:$0xf]
  %v28 = vld [vmem:[%s0 + $0x1c] sm:$0xf]
  %v29 = vld [vmem:[%s1] sm:$0xf]
  %v30 = vld [vmem:[%s1 + $0x4] sm:$0xf]
  %v31 = vld [vmem:[%s1 + $0x8] sm:$0xf]
  %v32 = vld [vmem:[%s1 + $0xc] sm:$0xf]
  %v33 = vld [vmem:[%s1 + $0x10] sm:$0xf]
  %v34 = vld [vmem:[%s1 + $0x14] sm:$0xf]
  %v35 = vld [vmem:[%s1 + $0x18] sm:$0xf]
  %v36 = vld [vmem:[%s1 + $0x1c] sm:$0xf]
  %v37 = vld [vmem:[%s1 + $0x20] sm:$0xf]
  %v38 = vld [vmem:[%s1 + $0x24] sm:$0xf]
  %v39 = vld [vmem:[%s1 + $0x28] sm:$0xf]
  %v40 = vld [vmem:[%s1 + $0x2c] sm:$0xf]
  %v41 = vld [vmem:[%s1 + $0x30] sm:$0xf]
  %v42 = vld [vmem:[%s1 + $0x34] sm:$0xf]
  %v43 = vld [vmem:[%s1 + $0x38] sm:$0xf]
  %v44 = vld [vmem:[%s1 + $0x3c] sm:$0xf]
  %v45 = vld [vmem:[%s2] sm:$0x1]
  %v47 = vlaneseq
  %v48 = vshrl.u32 %v47, 7
  %v49 = vsub.s32 0, %v48
  %v50 = vrot.slane %v45, %v49
  %v60 = vunpack.c.l.b16 %v21
  %v61 = vunpack.c.l.b16 %v22
  %v62 = vunpack.c.l.b16 %v23
  %v63 = vunpack.c.l.b16 %v24
  %v64 = vunpack.c.l.b16 %v25
  %v65 = vunpack.c.l.b16 %v26
  %v66 = vunpack.c.l.b16 %v27
  %v67 = vunpack.c.l.b16 %v28
  %v68 = vpack.c.b16 %v61, %v60
  %v69 = vpack.c.b16 %v63, %v62
  %v70 = vpack.c.b16 %v65, %v64
  %v71 = vpack.c.b16 %v67, %v66
  %v92 = vunpack.c.l.b16 %v29
  %v93 = vunpack.c.l.b16 %v30
  %v94 = vunpack.c.l.b16 %v31
  %v95 = vunpack.c.l.b16 %v32
  %v96 = vunpack.c.l.b16 %v33
  %v97 = vunpack.c.l.b16 %v34
  %v98 = vunpack.c.l.b16 %v35
  %v99 = vunpack.c.l.b16 %v36
  %v100 = vunpack.c.l.b16 %v37
  %v101 = vunpack.c.l.b16 %v38
  %v102 = vunpack.c.l.b16 %v39
  %v103 = vunpack.c.l.b16 %v40
  %v104 = vunpack.c.l.b16 %v41
  %v105 = vunpack.c.l.b16 %v42
  %v106 = vunpack.c.l.b16 %v43
  %v107 = vunpack.c.l.b16 %v44
  %v108 = vpack.c.b16 %v93, %v92
  %v109 = vpack.c.b16 %v95, %v94
  %v110 = vpack.c.b16 %v97, %v96
  %v111 = vpack.c.b16 %v99, %v98
  %v112 = vpack.c.b16 %v101, %v100
  %v113 = vpack.c.b16 %v103, %v102
  %v114 = vpack.c.b16 %v105, %v104
  %v115 = vpack.c.b16 %v107, %v106
  %124 = vmatprep.subr.bf16.mxu0 0
  %125 = vmatpush1.bf16.msra.mxu0 %v108
  %126 = vmatprep.subr.bf16.mxu0 0
  %127 = vmatpush1.bf16.msra.mxu0 %v109
  %128 = vmatprep.subr.bf16.mxu0 0
  %129 = vmatpush1.bf16.msra.mxu0 %v110
  %130 = vmatprep.subr.bf16.mxu0 0
  %131 = vmatpush1.bf16.msra.mxu0 %v111
  %132 = vmatprep.subr.bf16.mxu0 0
  %133 = vmatpush1.bf16.msra.mxu0 %v112
  %134 = vmatprep.subr.bf16.mxu0 0
  %135 = vmatpush1.bf16.msra.mxu0 %v113
  %136 = vmatprep.subr.bf16.mxu0 0
  %137 = vmatpush1.bf16.msra.mxu0 %v114
  %138 = vmatprep.subr.bf16.mxu0 0
  %139 = vmatpush1.bf16.msra.mxu0 %v115
  %140 = vmatprep.subr.bf16.mxu0 0
  %141 = vmatpush1.bf16.msra.mxu0 0
  %142 = vmatprep.subr.bf16.mxu0 0
  %143 = vmatpush1.bf16.msra.mxu0 0
  %144 = vmatprep.subr.bf16.mxu0 0
  %145 = vmatpush1.bf16.msra.mxu0 0
  %146 = vmatprep.subr.bf16.mxu0 0
  %147 = vmatpush1.bf16.msra.mxu0 0
  %148 = vmatprep.subr.bf16.mxu0 0
  %149 = vmatpush1.bf16.msra.mxu0 0
  %150 = vmatprep.subr.bf16.mxu0 0
  %151 = vmatpush1.bf16.msra.mxu0 0
  %152 = vmatprep.subr.bf16.mxu0 0
  %153 = vmatpush1.bf16.msra.mxu0 0
  %154 = vmatprep.subr.bf16.mxu0 0
  %155 = vmatpush1.bf16.msra.mxu0 0
  %156 = vmatprep.mubr.bf16.mxu0 0
  %157 = vmatmul.mubr.bf16.gmra.mrb[0].mxu0 %v68
  %v158 = vpop.f32.mrb[0].mxu0
  %v159 = vadd.f32 %v50, %v158
  %v160 = vpop.f32.mrb[0].mxu0
  %v161 = vpop.f32.mrb[0].mxu0
  %v162 = vadd.f32 %v50, %v161
  %v163 = vpop.f32.mrb[0].mxu0
  %164 = vmatprep.mubr.bf16.mxu0 0
  %165 = vmatmul.mubr.bf16.gmra.mrb[0].mxu0 %v69
  %v166 = vpop.f32.mrb[0].mxu0
  %v167 = vadd.f32 %v50, %v166
  %v168 = vpop.f32.mrb[0].mxu0
  %v169 = vpop.f32.mrb[0].mxu0
  %v170 = vadd.f32 %v50, %v169
  %v171 = vpop.f32.mrb[0].mxu0
  %172 = vmatprep.mubr.bf16.mxu0 0
  %173 = vmatmul.mubr.bf16.gmra.mrb[0].mxu0 %v70
  %v174 = vpop.f32.mrb[0].mxu0
  %v175 = vadd.f32 %v50, %v174
  %v176 = vpop.f32.mrb[0].mxu0
  %v177 = vpop.f32.mrb[0].mxu0
  %v178 = vadd.f32 %v50, %v177
  %v179 = vpop.f32.mrb[0].mxu0
  %180 = vmatprep.mubr.bf16.mxu0 0
  %181 = vmatmul.mubr.bf16.gmra.mrb[0].mxu0 %v71
  %v182 = vpop.f32.mrb[0].mxu0
  %v183 = vadd.f32 %v50, %v182
  %v184 = vpop.f32.mrb[0].mxu0
  %v185 = vpop.f32.mrb[0].mxu0
  %v186 = vadd.f32 %v50, %v185
  %v187 = vpop.f32.mrb[0].mxu0
  %188 = vdwg.mxu0
  %v189 = vmax.f32 %v159, 0.0
  %v190 = vmax.f32 %v162, 0.0
  %v191 = vmax.f32 %v167, 0.0
  %v192 = vmax.f32 %v170, 0.0
  %v193 = vmax.f32 %v175, 0.0
  %v194 = vmax.f32 %v178, 0.0
  %v195 = vmax.f32 %v183, 0.0
  %v196 = vmax.f32 %v186, 0.0
  %v197 = vmul.f32 %v189, 16.0
  %v198 = vmul.f32 %v190, 16.0
  %v199 = vmul.f32 %v191, 16.0
  %v200 = vmul.f32 %v192, 16.0
  %v201 = vmul.f32 %v193, 16.0
  %v202 = vmul.f32 %v194, 16.0
  %v203 = vmul.f32 %v195, 16.0
  %v204 = vmul.f32 %v196, 16.0
  %v205 = vround.ne.pseudo %v197
  %v206 = vround.ne.pseudo %v198
  %v207 = vround.ne.pseudo %v199
  %v208 = vround.ne.pseudo %v200
  %v209 = vround.ne.pseudo %v201
  %v210 = vround.ne.pseudo %v202
  %v211 = vround.ne.pseudo %v203
  %v212 = vround.ne.pseudo %v204
  %v213 = vmul.f32 %v205, 0.0625
  %v214 = vmul.f32 %v206, 0.0625
  %v215 = vmul.f32 %v207, 0.0625
  %v216 = vmul.f32 %v208, 0.0625
  %v217 = vmul.f32 %v209, 0.0625
  %v218 = vmul.f32 %v210, 0.0625
  %v219 = vmul.f32 %v211, 0.0625
  %v220 = vmul.f32 %v212, 0.0625
  %v221 = vpack.c.bf16 %v214, %v213
  %v222 = vpack.c.bf16 %v216, %v215
  %v223 = vpack.c.bf16 %v218, %v217
  %v224 = vpack.c.bf16 %v220, %v219
  %v225 = vld [vmem:[%s3] sm:$0xf]
  %v226 = vld [vmem:[%s3 + $0x4] sm:$0xf]
  %v227 = vld [vmem:[%s3 + $0x8] sm:$0xf]
  %v228 = vld [vmem:[%s3 + $0xc] sm:$0xf]
  %v229 = vld [vmem:[%s3 + $0x10] sm:$0xf]
  %v230 = vld [vmem:[%s3 + $0x14] sm:$0xf]
  %v231 = vld [vmem:[%s3 + $0x18] sm:$0xf]
  %v232 = vld [vmem:[%s3 + $0x1c] sm:$0xf]
  %v233 = vld [vmem:[%s3 + $0x20] sm:$0xf]
  %v234 = vld [vmem:[%s3 + $0x24] sm:$0xf]
  %v235 = vld [vmem:[%s3 + $0x28] sm:$0xf]
  %v236 = vld [vmem:[%s3 + $0x2c] sm:$0xf]
  %v237 = vld [vmem:[%s3 + $0x30] sm:$0xf]
  %v238 = vld [vmem:[%s3 + $0x34] sm:$0xf]
  %v239 = vld [vmem:[%s3 + $0x38] sm:$0xf]
  %v240 = vld [vmem:[%s3 + $0x3c] sm:$0xf]
  %v241 = vld [vmem:[%s4] sm:$0x1]
  %v243 = vlaneseq
  %v244 = vshrl.u32 %v243, 7
  %v245 = vsub.s32 0, %v244
  %v246 = vrot.slane %v241, %v245
  %v264 = vunpack.c.l.b16 %v225
  %v265 = vunpack.c.l.b16 %v226
  %v266 = vunpack.c.l.b16 %v227
  %v267 = vunpack.c.l.b16 %v228
  %v268 = vunpack.c.l.b16 %v229
  %v269 = vunpack.c.l.b16 %v230
  %v270 = vunpack.c.l.b16 %v231
  %v271 = vunpack.c.l.b16 %v232
  %v272 = vunpack.c.l.b16 %v233
  %v273 = vunpack.c.l.b16 %v234
  %v274 = vunpack.c.l.b16 %v235
  %v275 = vunpack.c.l.b16 %v236
  %v276 = vunpack.c.l.b16 %v237
  %v277 = vunpack.c.l.b16 %v238
  %v278 = vunpack.c.l.b16 %v239
  %v279 = vunpack.c.l.b16 %v240
  %v280 = vpack.c.b16 %v265, %v264
  %v281 = vpack.c.b16 %v267, %v266
  %v282 = vpack.c.b16 %v269, %v268
  %v283 = vpack.c.b16 %v271, %v270
  %v284 = vpack.c.b16 %v273, %v272
  %v285 = vpack.c.b16 %v275, %v274
  %v286 = vpack.c.b16 %v277, %v276
  %v287 = vpack.c.b16 %v279, %v278
  %296 = vmatprep.subr.bf16.mxu0 0
  %297 = vmatpush1.bf16.msra.mxu0 %v280
  %298 = vmatprep.subr.bf16.mxu0 0
  %299 = vmatpush1.bf16.msra.mxu0 %v281
  %300 = vmatprep.subr.bf16.mxu0 0
  %301 = vmatpush1.bf16.msra.mxu0 %v282
  %302 = vmatprep.subr.bf16.mxu0 0
  %303 = vmatpush1.bf16.msra.mxu0 %v283
  %304 = vmatprep.subr.bf16.mxu0 0
  %305 = vmatpush1.bf16.msra.mxu0 %v284
  %306 = vmatprep.subr.bf16.mxu0 0
  %307 = vmatpush1.bf16.msra.mxu0 %v285
  %308 = vmatprep.subr.bf16.mxu0 0
  %309 = vmatpush1.bf16.msra.mxu0 %v286
  %310 = vmatprep.subr.bf16.mxu0 0
  %311 = vmatpush1.bf16.msra.mxu0 %v287
  %312 = vmatprep.subr.bf16.mxu0 0
  %313 = vmatpush1.bf16.msra.mxu0 0
  %314 = vmatprep.subr.bf16.mxu0 0
  %315 = vmatpush1.bf16.msra.mxu0 0
  %316 = vmatprep.subr.bf16.mxu0 0
  %317 = vmatpush1.bf16.msra.mxu0 0
  %318 = vmatprep.subr.bf16.mxu0 0
  %319 = vmatpush1.bf16.msra.mxu0 0
  %320 = vmatprep.subr.bf16.mxu0 0
  %321 = vmatpush1.bf16.msra.mxu0 0
  %322 = vmatprep.subr.bf16.mxu0 0
  %323 = vmatpush1.bf16.msra.mxu0 0
  %324 = vmatprep.subr.bf16.mxu0 0
  %325 = vmatpush1.bf16.msra.mxu0 0
  %326 = vmatprep.subr.bf16.mxu0 0
  %327 = vmatpush1.bf16.msra.mxu0 0
  %328 = vmatprep.mubr.bf16.mxu0 0
  %329 = vmatmul.mubr.bf16.gmra.mrb[0].mxu0 %v221
  %v330 = vpop.f32.mrb[0].mxu0
  %v331 = vadd.f32 %v246, %v330
  %v332 = vpop.f32.mrb[0].mxu0
  %v333 = vpop.f32.mrb[0].mxu0
  %v334 = vadd.f32 %v246, %v333
  %v335 = vpop.f32.mrb[0].mxu0
  %336 = vmatprep.mubr.bf16.mxu0 0
  %337 = vmatmul.mubr.bf16.gmra.mrb[0].mxu0 %v222
  %v338 = vpop.f32.mrb[0].mxu0
  %v339 = vadd.f32 %v246, %v338
  %v340 = vpop.f32.mrb[0].mxu0
  %v341 = vpop.f32.mrb[0].mxu0
  %v342 = vadd.f32 %v246, %v341
  %v343 = vpop.f32.mrb[0].mxu0
  %344 = vmatprep.mubr.bf16.mxu0 0
  %345 = vmatmul.mubr.bf16.gmra.mrb[0].mxu0 %v223
  %v346 = vpop.f32.mrb[0].mxu0
  %v347 = vadd.f32 %v246, %v346
  %v348 = vpop.f32.mrb[0].mxu0
  %v349 = vpop.f32.mrb[0].mxu0
  %v350 = vadd.f32 %v246, %v349
  %v351 = vpop.f32.mrb[0].mxu0
  %352 = vmatprep.mubr.bf16.mxu0 0
  %353 = vmatmul.mubr.bf16.gmra.mrb[0].mxu0 %v224
  %v354 = vpop.f32.mrb[0].mxu0
  %v355 = vadd.f32 %v246, %v354
  %v356 = vpop.f32.mrb[0].mxu0
  %v357 = vpop.f32.mrb[0].mxu0
  %v358 = vadd.f32 %v246, %v357
  %v359 = vpop.f32.mrb[0].mxu0
  %360 = vdwg.mxu0
  %v361 = vpack.c.bf16 %v334, %v331
  %v362 = vpack.c.bf16 %v342, %v339
  %v363 = vpack.c.bf16 %v350, %v347
  %v364 = vpack.c.bf16 %v358, %v355
  %v369 = vunpack.c.l.b16 %v361
  %v370 = vunpack.c.h.b16 %v361
  %v371 = vunpack.c.l.b16 %v362
  %v372 = vunpack.c.h.b16 %v362
  %v373 = vunpack.c.l.b16 %v363
  %v374 = vunpack.c.h.b16 %v363
  %v375 = vunpack.c.l.b16 %v364
  %v376 = vunpack.c.h.b16 %v364
  %v377 = vpack.c.b16 %v369, %v369
  %v378 = vpack.c.b16 %v370, %v370
  %v379 = vpack.c.b16 %v371, %v371
  %v380 = vpack.c.b16 %v372, %v372
  %v381 = vpack.c.b16 %v373, %v373
  %v382 = vpack.c.b16 %v374, %v374
  %v383 = vpack.c.b16 %v375, %v375
  %v384 = vpack.c.b16 %v376, %v376
  %393 = vst [vmem:[%s5] sm:$0xf] %v377
  %394 = vst [vmem:[%s5 + $0x4] sm:$0xf] %v378
  %395 = vst [vmem:[%s5 + $0x8] sm:$0xf] %v379
  %396 = vst [vmem:[%s5 + $0xc] sm:$0xf] %v380
  %397 = vst [vmem:[%s5 + $0x10] sm:$0xf] %v381
  %398 = vst [vmem:[%s5 + $0x14] sm:$0xf] %v382
  %399 = vst [vmem:[%s5 + $0x18] sm:$0xf] %v383
  %400 = vst [vmem:[%s5 + $0x1c] sm:$0xf] %v384
  // Predicated region
  $region22: #{srnn_forward.2} parent=0 // pred_check
    _
  $region23: #{srnn_forward.2} parent=0 // pred_check_branch
    %402 = sbr.rel (0) target = $region25
  $region24: #{srnn_forward.2} parent=0 // pred_region
    _
  $region25: #{srnn_forward.2} parent=0 // pred_fallthru
    _
  // Predicated region
  $region26: #{srnn_forward.2} parent=0 // pred_check
    _
  $region27: #{srnn_forward.2} parent=0 // pred_check_branch
    %404 = sbr.rel (0) target = $region29
  $region28: #{srnn_forward.2} parent=0 // pred_region
    _
  $region29: #{srnn_forward.2} parent=0 // pred_fallthru
    _

// kernel: srnn_forward.3
$region0: #{srnn_forward.3}
  #allocation0 [shape = 'u32[]', space=smem, size = 0x4, offset = 0x4, fixed_abs, tag = 'smem constant byte address 0x4 - core index']
  #allocation1 [shape = 'u32[144,128]{1,0:T(1,128)}', space=vmem, size = 0x12000, scoped, tag = 'internal scratch']
  #allocation2 [shape = 'f32[8,128]{1,0:T(8,128)}', space=vmem, size = 0x1000, scoped, tag = 'scratch operand']
  #allocation3 [shape = 'bf16[8,128]{1,0:T(8,128)(2,1)}', space=vmem, size = 0x800, scoped, tag = 'scratch operand']
  %s0 = inlined_call_operand.vmem [shape: bf16[8,8,128], index: 0, kind: input, shape index: {}]
  %s1 = inlined_call_operand.vmem [shape: bf16[128,128], index: 1, kind: input, shape index: {}]
  %s2 = inlined_call_operand.vmem [shape: f32[8,128], index: 2, kind: output, shape index: {}]
  %s3 = sld [smem:[#allocation0]]
  $region22: #{srnn_forward.3} parent=0
    _
  %s5 = ssub.s32 1, %s3
  %s6 = scalar_select 0, %s5, %s3
  // Predicated region
  $region2: #{srnn_forward.3} parent=0 // pred_check
    _
  $region3: #{srnn_forward.3} parent=0 // pred_check_branch
    %8 = sbr.rel (0) target = $region5
  $region4: #{srnn_forward.3} parent=0 // pred_region
    _
  $region5: #{srnn_forward.3} parent=0 // pred_fallthru
    _
  // Predicated region
  $region6: #{srnn_forward.3} parent=0 // pred_check
    _
  $region7: #{srnn_forward.3} parent=0 // pred_check_branch
    %10 = sbr.rel (0) target = $region9
  $region8: #{srnn_forward.3} parent=0 // pred_region
    _
  $region9: #{srnn_forward.3} parent=0 // pred_fallthru
    _
  %p12 = scmp.eq.s32.totalorder 0, 0
  // Predicated region
  $region10: #{srnn_forward.3} parent=0 // pred_check
    %p13 = pneg %p12
  $region11: #{srnn_forward.3} parent=0 // pred_check_branch
    %15 = sbr.rel (%p13) target = $region13
  $region12: #{srnn_forward.3} parent=0 // pred_region
    %16 = vst [vmem:[#allocation2] sm:$0xff] 0.0
    %17 = vst [vmem:[#allocation3] sm:$0xf] 0
    %18 = vst [vmem:[%s2] sm:$0xff] 0.0
  $region13: #{srnn_forward.3} parent=0 // pred_fallthru
    _
  %v19 = vld [vmem:[#allocation3] sm:$0xf]
  %v20 = vld [vmem:[#allocation2] sm:$0xff]
  %v21 = vunpack.c.l.bf16 %v19
  %v22 = vsub.f32 1.0, %v21
  %v23 = vmul.f32 %v22, 0.2
  %v24 = vmul.f32 %v20, %v23
  %v25 = vld [vmem:[%s1] sm:$0xf]
  %v26 = vld [vmem:[%s1 + $0x4] sm:$0xf]
  %v27 = vld [vmem:[%s1 + $0x8] sm:$0xf]
  %v28 = vld [vmem:[%s1 + $0xc] sm:$0xf]
  %v29 = vld [vmem:[%s1 + $0x10] sm:$0xf]
  %v30 = vld [vmem:[%s1 + $0x14] sm:$0xf]
  %v31 = vld [vmem:[%s1 + $0x18] sm:$0xf]
  %v32 = vld [vmem:[%s1 + $0x1c] sm:$0xf]
  %v33 = vld [vmem:[%s1 + $0x20] sm:$0xf]
  %v34 = vld [vmem:[%s1 + $0x24] sm:$0xf]
  %v35 = vld [vmem:[%s1 + $0x28] sm:$0xf]
  %v36 = vld [vmem:[%s1 + $0x2c] sm:$0xf]
  %v37 = vld [vmem:[%s1 + $0x30] sm:$0xf]
  %v38 = vld [vmem:[%s1 + $0x34] sm:$0xf]
  %v39 = vld [vmem:[%s1 + $0x38] sm:$0xf]
  %v40 = vld [vmem:[%s1 + $0x3c] sm:$0xf]
  %v57 = vunpack.c.l.b16 %v25
  %v58 = vunpack.c.l.b16 %v26
  %v59 = vunpack.c.l.b16 %v27
  %v60 = vunpack.c.l.b16 %v28
  %v61 = vunpack.c.l.b16 %v29
  %v62 = vunpack.c.l.b16 %v30
  %v63 = vunpack.c.l.b16 %v31
  %v64 = vunpack.c.l.b16 %v32
  %v65 = vunpack.c.l.b16 %v33
  %v66 = vunpack.c.l.b16 %v34
  %v67 = vunpack.c.l.b16 %v35
  %v68 = vunpack.c.l.b16 %v36
  %v69 = vunpack.c.l.b16 %v37
  %v70 = vunpack.c.l.b16 %v38
  %v71 = vunpack.c.l.b16 %v39
  %v72 = vunpack.c.l.b16 %v40
  %v73 = vpack.c.b16 %v58, %v57
  %v74 = vpack.c.b16 %v60, %v59
  %v75 = vpack.c.b16 %v62, %v61
  %v76 = vpack.c.b16 %v64, %v63
  %v77 = vpack.c.b16 %v66, %v65
  %v78 = vpack.c.b16 %v68, %v67
  %v79 = vpack.c.b16 %v70, %v69
  %v80 = vpack.c.b16 %v72, %v71
  %89 = vmatprep.subr.bf16.mxu0 0
  %90 = vmatpush1.bf16.msra.mxu0 %v73
  %91 = vmatprep.subr.bf16.mxu0 0
  %92 = vmatpush1.bf16.msra.mxu0 %v74
  %93 = vmatprep.subr.bf16.mxu0 0
  %94 = vmatpush1.bf16.msra.mxu0 %v75
  %95 = vmatprep.subr.bf16.mxu0 0
  %96 = vmatpush1.bf16.msra.mxu0 %v76
  %97 = vmatprep.subr.bf16.mxu0 0
  %98 = vmatpush1.bf16.msra.mxu0 %v77
  %99 = vmatprep.subr.bf16.mxu0 0
  %100 = vmatpush1.bf16.msra.mxu0 %v78
  %101 = vmatprep.subr.bf16.mxu0 0
  %102 = vmatpush1.bf16.msra.mxu0 %v79
  %103 = vmatprep.subr.bf16.mxu0 0
  %104 = vmatpush1.bf16.msra.mxu0 %v80
  %105 = vmatprep.subr.bf16.mxu0 0
  %106 = vmatpush1.bf16.msra.mxu0 0
  %107 = vmatprep.subr.bf16.mxu0 0
  %108 = vmatpush1.bf16.msra.mxu0 0
  %109 = vmatprep.subr.bf16.mxu0 0
  %110 = vmatpush1.bf16.msra.mxu0 0
  %111 = vmatprep.subr.bf16.mxu0 0
  %112 = vmatpush1.bf16.msra.mxu0 0
  %113 = vmatprep.subr.bf16.mxu0 0
  %114 = vmatpush1.bf16.msra.mxu0 0
  %115 = vmatprep.subr.bf16.mxu0 0
  %116 = vmatpush1.bf16.msra.mxu0 0
  %117 = vmatprep.subr.bf16.mxu0 0
  %118 = vmatpush1.bf16.msra.mxu0 0
  %119 = vmatprep.subr.bf16.mxu0 0
  %120 = vmatpush1.bf16.msra.mxu0 0
  %121 = vmatprep.mubr.bf16.mxu0 0
  %122 = vmatmul.mubr.bf16.gmra.mrb[0].mxu0 %v19
  %v123 = vpop.f32.mrb[0].mxu0
  %v124 = vadd.f32 0.0, %v123
  %v125 = vpop.f32.mrb[0].mxu0
  %v126 = vpop.f32.mrb[0].mxu0
  %v127 = vpop.f32.mrb[0].mxu0
  %128 = vdwg.mxu0
  %v129 = vld [vmem:[%s0] sm:$0xf]
  %v130 = vunpack.c.l.bf16 %v129
  %v131 = vadd.f32 %v24, %v130
  %v132 = vadd.f32 %v131, %v124
  %vm133 = vcmp.gt.f32.partialorder %v132, 0.5
  %134 = vst [vmem:[#allocation2] sm:$0xff] %v132
  %v135 = vsel %vm133, 1, 0
  %v136 = vcvt.s32.f32 %v135
  %v137 = vpack.c.bf16 %v136, %v136
  %138 = vst [vmem:[#allocation3] sm:$0xf] %v137
  %v139 = vld [vmem:[%s2] sm:$0xff]
  %v140 = vadd.f32 %v139, %v136
  %141 = vst [vmem:[%s2] sm:$0xff] %v140
  %v142 = vld [vmem:[#allocation3] sm:$0xf]
  %v143 = vld [vmem:[#allocation2] sm:$0xff]
  %v144 = vunpack.c.l.bf16 %v142
  %v145 = vsub.f32 1.0, %v144
  %v146 = vmul.f32 %v145, 0.2
  %v147 = vmul.f32 %v143, %v146
  %v148 = vld [vmem:[%s1] sm:$0xf]
  %v149 = vld [vmem:[%s1 + $0x4] sm:$0xf]
  %v150 = vld [vmem:[%s1 + $0x8] sm:$0xf]
  %v151 = vld [vmem:[%s1 + $0xc] sm:$0xf]
  %v152 = vld [vmem:[%s1 + $0x10] sm:$0xf]
  %v153 = vld [vmem:[%s1 + $0x14] sm:$0xf]
  %v154 = vld [vmem:[%s1 + $0x18] sm:$0xf]
  %v155 = vld [vmem:[%s1 + $0x1c] sm:$0xf]
  %v156 = vld [vmem:[%s1 + $0x20] sm:$0xf]
  %v157 = vld [vmem:[%s1 + $0x24] sm:$0xf]
  %v158 = vld [vmem:[%s1 + $0x28] sm:$0xf]
  %v159 = vld [vmem:[%s1 + $0x2c] sm:$0xf]
  %v160 = vld [vmem:[%s1 + $0x30] sm:$0xf]
  %v161 = vld [vmem:[%s1 + $0x34] sm:$0xf]
  %v162 = vld [vmem:[%s1 + $0x38] sm:$0xf]
  %v163 = vld [vmem:[%s1 + $0x3c] sm:$0xf]
  %v180 = vunpack.c.l.b16 %v148
  %v181 = vunpack.c.l.b16 %v149
  %v182 = vunpack.c.l.b16 %v150
  %v183 = vunpack.c.l.b16 %v151
  %v184 = vunpack.c.l.b16 %v152
  %v185 = vunpack.c.l.b16 %v153
  %v186 = vunpack.c.l.b16 %v154
  %v187 = vunpack.c.l.b16 %v155
  %v188 = vunpack.c.l.b16 %v156
  %v189 = vunpack.c.l.b16 %v157
  %v190 = vunpack.c.l.b16 %v158
  %v191 = vunpack.c.l.b16 %v159
  %v192 = vunpack.c.l.b16 %v160
  %v193 = vunpack.c.l.b16 %v161
  %v194 = vunpack.c.l.b16 %v162
  %v195 = vunpack.c.l.b16 %v163
  %v196 = vpack.c.b16 %v181, %v180
  %v197 = vpack.c.b16 %v183, %v182
  %v198 = vpack.c.b16 %v185, %v184
  %v199 = vpack.c.b16 %v187, %v186
  %v200 = vpack.c.b16 %v189, %v188
  %v201 = vpack.c.b16 %v191, %v190
  %v202 = vpack.c.b16 %v193, %v192
  %v203 = vpack.c.b16 %v195, %v194
  %212 = vmatprep.subr.bf16.mxu0 0
  %213 = vmatpush1.bf16.msra.mxu0 %v196
  %214 = vmatprep.subr.bf16.mxu0 0
  %215 = vmatpush1.bf16.msra.mxu0 %v197
  %216 = vmatprep.subr.bf16.mxu0 0
  %217 = vmatpush1.bf16.msra.mxu0 %v198
  %218 = vmatprep.subr.bf16.mxu0 0
  %219 = vmatpush1.bf16.msra.mxu0 %v199
  %220 = vmatprep.subr.bf16.mxu0 0
  %221 = vmatpush1.bf16.msra.mxu0 %v200
  %222 = vmatprep.subr.bf16.mxu0 0
  %223 = vmatpush1.bf16.msra.mxu0 %v201
  %224 = vmatprep.subr.bf16.mxu0 0
  %225 = vmatpush1.bf16.msra.mxu0 %v202
  %226 = vmatprep.subr.bf16.mxu0 0
  %227 = vmatpush1.bf16.msra.mxu0 %v203
  %228 = vmatprep.subr.bf16.mxu0 0
  %229 = vmatpush1.bf16.msra.mxu0 0
  %230 = vmatprep.subr.bf16.mxu0 0
  %231 = vmatpush1.bf16.msra.mxu0 0
  %232 = vmatprep.subr.bf16.mxu0 0
  %233 = vmatpush1.bf16.msra.mxu0 0
  %234 = vmatprep.subr.bf16.mxu0 0
  %235 = vmatpush1.bf16.msra.mxu0 0
  %236 = vmatprep.subr.bf16.mxu0 0
  %237 = vmatpush1.bf16.msra.mxu0 0
  %238 = vmatprep.subr.bf16.mxu0 0
  %239 = vmatpush1.bf16.msra.mxu0 0
  %240 = vmatprep.subr.bf16.mxu0 0
  %241 = vmatpush1.bf16.msra.mxu0 0
  %242 = vmatprep.subr.bf16.mxu0 0
  %243 = vmatpush1.bf16.msra.mxu0 0
  %244 = vmatprep.mubr.bf16.mxu0 0
  %245 = vmatmul.mubr.bf16.gmra.mrb[0].mxu0 %v142
  %v246 = vpop.f32.mrb[0].mxu0
  %v247 = vadd.f32 0.0, %v246
  %v248 = vpop.f32.mrb[0].mxu0
  %v249 = vpop.f32.mrb[0].mxu0
  %v250 = vpop.f32.mrb[0].mxu0
  %251 = vdwg.mxu0
  %s252 = scalar_lea.vmem %s0, 4
  %v253 = vld [vmem:[%s252] sm:$0xf]
  %v254 = vunpack.c.l.bf16 %v253
  %v255 = vadd.f32 %v147, %v254
  %v256 = vadd.f32 %v255, %v247
  %vm257 = vcmp.gt.f32.partialorder %v256, 0.5
  %258 = vst [vmem:[#allocation2] sm:$0xff] %v256
  %v259 = vsel %vm257, 1, 0
  %v260 = vcvt.s32.f32 %v259
  %v261 = vpack.c.bf16 %v260, %v260
  %262 = vst [vmem:[#allocation3] sm:$0xf] %v261
  %v263 = vld [vmem:[%s2] sm:$0xff]
  %v264 = vadd.f32 %v263, %v260
  %265 = vst [vmem:[%s2] sm:$0xff] %v264
  %v266 = vld [vmem:[#allocation3] sm:$0xf]
  %v267 = vld [vmem:[#allocation2] sm:$0xff]
  %v268 = vunpack.c.l.bf16 %v266
  %v269 = vsub.f32 1.0, %v268
  %v270 = vmul.f32 %v269, 0.2
  %v271 = vmul.f32 %v267, %v270
  %v272 = vld [vmem:[%s1] sm:$0xf]
  %v273 = vld [vmem:[%s1 + $0x4] sm:$0xf]
  %v274 = vld [vmem:[%s1 + $0x8] sm:$0xf]
  %v275 = vld [vmem:[%s1 + $0xc] sm:$0xf]
  %v276 = vld [vmem:[%s1 + $0x10] sm:$0xf]
  %v277 = vld [vmem:[%s1 + $0x14] sm:$0xf]
  %v278 = vld [vmem:[%s1 + $0x18] sm:$0xf]
  %v279 = vld [vmem:[%s1 + $0x1c] sm:$0xf]
  %v280 = vld [vmem:[%s1 + $0x20] sm:$0xf]
  %v281 = vld [vmem:[%s1 + $0x24] sm:$0xf]
  %v282 = vld [vmem:[%s1 + $0x28] sm:$0xf]
  %v283 = vld [vmem:[%s1 + $0x2c] sm:$0xf]
  %v284 = vld [vmem:[%s1 + $0x30] sm:$0xf]
  %v285 = vld [vmem:[%s1 + $0x34] sm:$0xf]
  %v286 = vld [vmem:[%s1 + $0x38] sm:$0xf]
  %v287 = vld [vmem:[%s1 + $0x3c] sm:$0xf]
  %v304 = vunpack.c.l.b16 %v272
  %v305 = vunpack.c.l.b16 %v273
  %v306 = vunpack.c.l.b16 %v274
  %v307 = vunpack.c.l.b16 %v275
  %v308 = vunpack.c.l.b16 %v276
  %v309 = vunpack.c.l.b16 %v277
  %v310 = vunpack.c.l.b16 %v278
  %v311 = vunpack.c.l.b16 %v279
  %v312 = vunpack.c.l.b16 %v280
  %v313 = vunpack.c.l.b16 %v281
  %v314 = vunpack.c.l.b16 %v282
  %v315 = vunpack.c.l.b16 %v283
  %v316 = vunpack.c.l.b16 %v284
  %v317 = vunpack.c.l.b16 %v285
  %v318 = vunpack.c.l.b16 %v286
  %v319 = vunpack.c.l.b16 %v287
  %v320 = vpack.c.b16 %v305, %v304
  %v321 = vpack.c.b16 %v307, %v306
  %v322 = vpack.c.b16 %v309, %v308
  %v323 = vpack.c.b16 %v311, %v310
  %v324 = vpack.c.b16 %v313, %v312
  %v325 = vpack.c.b16 %v315, %v314
  %v326 = vpack.c.b16 %v317, %v316
  %v327 = vpack.c.b16 %v319, %v318
  %336 = vmatprep.subr.bf16.mxu0 0
  %337 = vmatpush1.bf16.msra.mxu0 %v320
  %338 = vmatprep.subr.bf16.mxu0 0
  %339 = vmatpush1.bf16.msra.mxu0 %v321
  %340 = vmatprep.subr.bf16.mxu0 0
  %341 = vmatpush1.bf16.msra.mxu0 %v322
  %342 = vmatprep.subr.bf16.mxu0 0
  %343 = vmatpush1.bf16.msra.mxu0 %v323
  %344 = vmatprep.subr.bf16.mxu0 0
  %345 = vmatpush1.bf16.msra.mxu0 %v324
  %346 = vmatprep.subr.bf16.mxu0 0
  %347 = vmatpush1.bf16.msra.mxu0 %v325
  %348 = vmatprep.subr.bf16.mxu0 0
  %349 = vmatpush1.bf16.msra.mxu0 %v326
  %350 = vmatprep.subr.bf16.mxu0 0
  %351 = vmatpush1.bf16.msra.mxu0 %v327
  %352 = vmatprep.subr.bf16.mxu0 0
  %353 = vmatpush1.bf16.msra.mxu0 0
  %354 = vmatprep.subr.bf16.mxu0 0
  %355 = vmatpush1.bf16.msra.mxu0 0
  %356 = vmatprep.subr.bf16.mxu0 0
  %357 = vmatpush1.bf16.msra.mxu0 0
  %358 = vmatprep.subr.bf16.mxu0 0
  %359 = vmatpush1.bf16.msra.mxu0 0
  %360 = vmatprep.subr.bf16.mxu0 0
  %361 = vmatpush1.bf16.msra.mxu0 0
  %362 = vmatprep.subr.bf16.mxu0 0
  %363 = vmatpush1.bf16.msra.mxu0 0
  %364 = vmatprep.subr.bf16.mxu0 0
  %365 = vmatpush1.bf16.msra.mxu0 0
  %366 = vmatprep.subr.bf16.mxu0 0
  %367 = vmatpush1.bf16.msra.mxu0 0
  %368 = vmatprep.mubr.bf16.mxu0 0
  %369 = vmatmul.mubr.bf16.gmra.mrb[0].mxu0 %v266
  %v370 = vpop.f32.mrb[0].mxu0
  %v371 = vadd.f32 0.0, %v370
  %v372 = vpop.f32.mrb[0].mxu0
  %v373 = vpop.f32.mrb[0].mxu0
  %v374 = vpop.f32.mrb[0].mxu0
  %375 = vdwg.mxu0
  %s376 = scalar_lea.vmem %s0, 8
  %v377 = vld [vmem:[%s376] sm:$0xf]
  %v378 = vunpack.c.l.bf16 %v377
  %v379 = vadd.f32 %v271, %v378
  %v380 = vadd.f32 %v379, %v371
  %vm381 = vcmp.gt.f32.partialorder %v380, 0.5
  %382 = vst [vmem:[#allocation2] sm:$0xff] %v380
  %v383 = vsel %vm381, 1, 0
  %v384 = vcvt.s32.f32 %v383
  %v385 = vpack.c.bf16 %v384, %v384
  %386 = vst [vmem:[#allocation3] sm:$0xf] %v385
  %v387 = vld [vmem:[%s2] sm:$0xff]
  %v388 = vadd.f32 %v387, %v384
  %389 = vst [vmem:[%s2] sm:$0xff] %v388
  %v390 = vld [vmem:[#allocation3] sm:$0xf]
  %v391 = vld [vmem:[#allocation2] sm:$0xff]
  %v392 = vunpack.c.l.bf16 %v390
  %v393 = vsub.f32 1.0, %v392
  %v394 = vmul.f32 %v393, 0.2
  %v395 = vmul.f32 %v391, %v394
  %v396 = vld [vmem:[%s1] sm:$0xf]
  %v397 = vld [vmem:[%s1 + $0x4] sm:$0xf]
  %v398 = vld [vmem:[%s1 + $0x8] sm:$0xf]
  %v399 = vld [vmem:[%s1 + $0xc] sm:$0xf]
  %v400 = vld [vmem:[%s1 + $0x10] sm:$0xf]
  %v401 = vld [vmem:[%s1 + $0x14] sm:$0xf]
  %v402 = vld [vmem:[%s1 + $0x18] sm:$0xf]
  %v403 = vld [vmem:[%s1 + $0x1c] sm:$0xf]
  %v404 = vld [vmem:[%s1 + $0x20] sm:$0xf]
  %v405 = vld [vmem:[%s1 + $0x24] sm:$0xf]
  %v406 = vld [vmem:[%s1 + $0x28] sm:$0xf]
  %v407 = vld [vmem:[%s1 + $0x2c] sm:$0xf]
  %v408 = vld [vmem:[%s1 + $0x30] sm:$0xf]
  %v409 = vld [vmem:[%s1 + $0x34] sm:$0xf]
  %v410 = vld [vmem:[%s1 + $0x38] sm:$0xf]
  %v411 = vld [vmem:[%s1 + $0x3c] sm:$0xf]
  %v428 = vunpack.c.l.b16 %v396
  %v429 = vunpack.c.l.b16 %v397
  %v430 = vunpack.c.l.b16 %v398
  %v431 = vunpack.c.l.b16 %v399
  %v432 = vunpack.c.l.b16 %v400
  %v433 = vunpack.c.l.b16 %v401
  %v434 = vunpack.c.l.b16 %v402
  %v435 = vunpack.c.l.b16 %v403
  %v436 = vunpack.c.l.b16 %v404
  %v437 = vunpack.c.l.b16 %v405
  %v438 = vunpack.c.l.b16 %v406
  %v439 = vunpack.c.l.b16 %v407
  %v440 = vunpack.c.l.b16 %v408
  %v441 = vunpack.c.l.b16 %v409
  %v442 = vunpack.c.l.b16 %v410
  %v443 = vunpack.c.l.b16 %v411
  %v444 = vpack.c.b16 %v429, %v428
  %v445 = vpack.c.b16 %v431, %v430
  %v446 = vpack.c.b16 %v433, %v432
  %v447 = vpack.c.b16 %v435, %v434
  %v448 = vpack.c.b16 %v437, %v436
  %v449 = vpack.c.b16 %v439, %v438
  %v450 = vpack.c.b16 %v441, %v440
  %v451 = vpack.c.b16 %v443, %v442
  %460 = vmatprep.subr.bf16.mxu0 0
  %461 = vmatpush1.bf16.msra.mxu0 %v444
  %462 = vmatprep.subr.bf16.mxu0 0
  %463 = vmatpush1.bf16.msra.mxu0 %v445
  %464 = vmatprep.subr.bf16.mxu0 0
  %465 = vmatpush1.bf16.msra.mxu0 %v446
  %466 = vmatprep.subr.bf16.mxu0 0
  %467 = vmatpush1.bf16.msra.mxu0 %v447
  %468 = vmatprep.subr.bf16.mxu0 0
  %469 = vmatpush1.bf16.msra.mxu0 %v448
  %470 = vmatprep.subr.bf16.mxu0 0
  %471 = vmatpush1.bf16.msra.mxu0 %v449
  %472 = vmatprep.subr.bf16.mxu0 0
  %473 = vmatpush1.bf16.msra.mxu0 %v450
  %474 = vmatprep.subr.bf16.mxu0 0
  %475 = vmatpush1.bf16.msra.mxu0 %v451
  %476 = vmatprep.subr.bf16.mxu0 0
  %477 = vmatpush1.bf16.msra.mxu0 0
  %478 = vmatprep.subr.bf16.mxu0 0
  %479 = vmatpush1.bf16.msra.mxu0 0
  %480 = vmatprep.subr.bf16.mxu0 0
  %481 = vmatpush1.bf16.msra.mxu0 0
  %482 = vmatprep.subr.bf16.mxu0 0
  %483 = vmatpush1.bf16.msra.mxu0 0
  %484 = vmatprep.subr.bf16.mxu0 0
  %485 = vmatpush1.bf16.msra.mxu0 0
  %486 = vmatprep.subr.bf16.mxu0 0
  %487 = vmatpush1.bf16.msra.mxu0 0
  %488 = vmatprep.subr.bf16.mxu0 0
  %489 = vmatpush1.bf16.msra.mxu0 0
  %490 = vmatprep.subr.bf16.mxu0 0
  %491 = vmatpush1.bf16.msra.mxu0 0
  %492 = vmatprep.mubr.bf16.mxu0 0
  %493 = vmatmul.mubr.bf16.gmra.mrb[0].mxu0 %v390
  %v494 = vpop.f32.mrb[0].mxu0
  %v495 = vadd.f32 0.0, %v494
  %v496 = vpop.f32.mrb[0].mxu0
  %v497 = vpop.f32.mrb[0].mxu0
  %v498 = vpop.f32.mrb[0].mxu0
  %499 = vdwg.mxu0
  %s500 = scalar_lea.vmem %s0, 12
  %v501 = vld [vmem:[%s500] sm:$0xf]
  %v502 = vunpack.c.l.bf16 %v501
  %v503 = vadd.f32 %v395, %v502
  %v504 = vadd.f32 %v503, %v495
  %vm505 = vcmp.gt.f32.partialorder %v504, 0.5
  %506 = vst [vmem:[#allocation2] sm:$0xff] %v504
  %v507 = vsel %vm505, 1, 0
  %v508 = vcvt.s32.f32 %v507
  %v509 = vpack.c.bf16 %v508, %v508
  %510 = vst [vmem:[#allocation3] sm:$0xf] %v509
  %v511 = vld [vmem:[%s2] sm:$0xff]
  %v512 = vadd.f32 %v511, %v508
  %513 = vst [vmem:[%s2] sm:$0xff] %v512
  %v514 = vld [vmem:[#allocation3] sm:$0xf]
  %v515 = vld [vmem:[#allocation2] sm:$0xff]
  %v516 = vunpack.c.l.bf16 %v514
  %v517 = vsub.f32 1.0, %v516
  %v518 = vmul.f32 %v517, 0.2
  %v519 = vmul.f32 %v515, %v518
  %v520 = vld [vmem:[%s1] sm:$0xf]
  %v521 = vld [vmem:[%s1 + $0x4] sm:$0xf]
  %v522 = vld [vmem:[%s1 + $0x8] sm:$0xf]
  %v523 = vld [vmem:[%s1 + $0xc] sm:$0xf]
  %v524 = vld [vmem:[%s1 + $0x10] sm:$0xf]
  %v525 = vld [vmem:[%s1 + $0x14] sm:$0xf]
  %v526 = vld [vmem:[%s1 + $0x18] sm:$0xf]
  %v527 = vld [vmem:[%s1 + $0x1c] sm:$0xf]
  %v528 = vld [vmem:[%s1 + $0x20] sm:$0xf]
  %v529 = vld [vmem:[%s1 + $0x24] sm:$0xf]
  %v530 = vld [vmem:[%s1 + $0x28] sm:$0xf]
  %v531 = vld [vmem:[%s1 + $0x2c] sm:$0xf]
  %v532 = vld [vmem:[%s1 + $0x30] sm:$0xf]
  %v533 = vld [vmem:[%s1 + $0x34] sm:$0xf]
  %v534 = vld [vmem:[%s1 + $0x38] sm:$0xf]
  %v535 = vld [vmem:[%s1 + $0x3c] sm:$0xf]
  %v552 = vunpack.c.l.b16 %v520
  %v553 = vunpack.c.l.b16 %v521
  %v554 = vunpack.c.l.b16 %v522
  %v555 = vunpack.c.l.b16 %v523
  %v556 = vunpack.c.l.b16 %v524
  %v557 = vunpack.c.l.b16 %v525
  %v558 = vunpack.c.l.b16 %v526
  %v559 = vunpack.c.l.b16 %v527
  %v560 = vunpack.c.l.b16 %v528
  %v561 = vunpack.c.l.b16 %v529
  %v562 = vunpack.c.l.b16 %v530
  %v563 = vunpack.c.l.b16 %v531
  %v564 = vunpack.c.l.b16 %v532
  %v565 = vunpack.c.l.b16 %v533
  %v566 = vunpack.c.l.b16 %v534
  %v567 = vunpack.c.l.b16 %v535
  %v568 = vpack.c.b16 %v553, %v552
  %v569 = vpack.c.b16 %v555, %v554
  %v570 = vpack.c.b16 %v557, %v556
  %v571 = vpack.c.b16 %v559, %v558
  %v572 = vpack.c.b16 %v561, %v560
  %v573 = vpack.c.b16 %v563, %v562
  %v574 = vpack.c.b16 %v565, %v564
  %v575 = vpack.c.b16 %v567, %v566
  %584 = vmatprep.subr.bf16.mxu0 0
  %585 = vmatpush1.bf16.msra.mxu0 %v568
  %586 = vmatprep.subr.bf16.mxu0 0
  %587 = vmatpush1.bf16.msra.mxu0 %v569
  %588 = vmatprep.subr.bf16.mxu0 0
  %589 = vmatpush1.bf16.msra.mxu0 %v570
  %590 = vmatprep.subr.bf16.mxu0 0
  %591 = vmatpush1.bf16.msra.mxu0 %v571
  %592 = vmatprep.subr.bf16.mxu0 0
  %593 = vmatpush1.bf16.msra.mxu0 %v572
  %594 = vmatprep.subr.bf16.mxu0 0
  %595 = vmatpush1.bf16.msra.mxu0 %v573
  %596 = vmatprep.subr.bf16.mxu0 0
  %597 = vmatpush1.bf16.msra.mxu0 %v574
  %598 = vmatprep.subr.bf16.mxu0 0
  %599 = vmatpush1.bf16.msra.mxu0 %v575
  %600 = vmatprep.subr.bf16.mxu0 0
  %601 = vmatpush1.bf16.msra.mxu0 0
  %602 = vmatprep.subr.bf16.mxu0 0
  %603 = vmatpush1.bf16.msra.mxu0 0
  %604 = vmatprep.subr.bf16.mxu0 0
  %605 = vmatpush1.bf16.msra.mxu0 0
  %606 = vmatprep.subr.bf16.mxu0 0
  %607 = vmatpush1.bf16.msra.mxu0 0
  %608 = vmatprep.subr.bf16.mxu0 0
  %609 = vmatpush1.bf16.msra.mxu0 0
  %610 = vmatprep.subr.bf16.mxu0 0
  %611 = vmatpush1.bf16.msra.mxu0 0
  %612 = vmatprep.subr.bf16.mxu0 0
  %613 = vmatpush1.bf16.msra.mxu0 0
  %614 = vmatprep.subr.bf16.mxu0 0
  %615 = vmatpush1.bf16.msra.mxu0 0
  %616 = vmatprep.mubr.bf16.mxu0 0
  %617 = vmatmul.mubr.bf16.gmra.mrb[0].mxu0 %v514
  %v618 = vpop.f32.mrb[0].mxu0
  %v619 = vadd.f32 0.0, %v618
  %v620 = vpop.f32.mrb[0].mxu0
  %v621 = vpop.f32.mrb[0].mxu0
  %v622 = vpop.f32.mrb[0].mxu0
  %623 = vdwg.mxu0
  %s624 = scalar_lea.vmem %s0, 16
  %v625 = vld [vmem:[%s624] sm:$0xf]
  %v626 = vunpack.c.l.bf16 %v625
  %v627 = vadd.f32 %v519, %v626
  %v628 = vadd.f32 %v627, %v619
  %vm629 = vcmp.gt.f32.partialorder %v628, 0.5
  %630 = vst [vmem:[#allocation2] sm:$0xff] %v628
  %v631 = vsel %vm629, 1, 0
  %v632 = vcvt.s32.f32 %v631
  %v633 = vpack.c.bf16 %v632, %v632
  %634 = vst [vmem:[#allocation3] sm:$0xf] %v633
  %v635 = vld [vmem:[%s2] sm:$0xff]
  %v636 = vadd.f32 %v635, %v632
  %637 = vst [vmem:[%s2] sm:$0xff] %v636
  %v638 = vld [vmem:[#allocation3] sm:$0xf]
  %v639 = vld [vmem:[#allocation2] sm:$0xff]
  %v640 = vunpack.c.l.bf16 %v638
  %v641 = vsub.f32 1.0, %v640
  %v642 = vmul.f32 %v641, 0.2
  %v643 = vmul.f32 %v639, %v642
  %v644 = vld [vmem:[%s1] sm:$0xf]
  %v645 = vld [vmem:[%s1 + $0x4] sm:$0xf]
  %v646 = vld [vmem:[%s1 + $0x8] sm:$0xf]
  %v647 = vld [vmem:[%s1 + $0xc] sm:$0xf]
  %v648 = vld [vmem:[%s1 + $0x10] sm:$0xf]
  %v649 = vld [vmem:[%s1 + $0x14] sm:$0xf]
  %v650 = vld [vmem:[%s1 + $0x18] sm:$0xf]
  %v651 = vld [vmem:[%s1 + $0x1c] sm:$0xf]
  %v652 = vld [vmem:[%s1 + $0x20] sm:$0xf]
  %v653 = vld [vmem:[%s1 + $0x24] sm:$0xf]
  %v654 = vld [vmem:[%s1 + $0x28] sm:$0xf]
  %v655 = vld [vmem:[%s1 + $0x2c] sm:$0xf]
  %v656 = vld [vmem:[%s1 + $0x30] sm:$0xf]
  %v657 = vld [vmem:[%s1 + $0x34] sm:$0xf]
  %v658 = vld [vmem:[%s1 + $0x38] sm:$0xf]
  %v659 = vld [vmem:[%s1 + $0x3c] sm:$0xf]
  %v676 = vunpack.c.l.b16 %v644
  %v677 = vunpack.c.l.b16 %v645
  %v678 = vunpack.c.l.b16 %v646
  %v679 = vunpack.c.l.b16 %v647
  %v680 = vunpack.c.l.b16 %v648
  %v681 = vunpack.c.l.b16 %v649
  %v682 = vunpack.c.l.b16 %v650
  %v683 = vunpack.c.l.b16 %v651
  %v684 = vunpack.c.l.b16 %v652
  %v685 = vunpack.c.l.b16 %v653
  %v686 = vunpack.c.l.b16 %v654
  %v687 = vunpack.c.l.b16 %v655
  %v688 = vunpack.c.l.b16 %v656
  %v689 = vunpack.c.l.b16 %v657
  %v690 = vunpack.c.l.b16 %v658
  %v691 = vunpack.c.l.b16 %v659
  %v692 = vpack.c.b16 %v677, %v676
  %v693 = vpack.c.b16 %v679, %v678
  %v694 = vpack.c.b16 %v681, %v680
  %v695 = vpack.c.b16 %v683, %v682
  %v696 = vpack.c.b16 %v685, %v684
  %v697 = vpack.c.b16 %v687, %v686
  %v698 = vpack.c.b16 %v689, %v688
  %v699 = vpack.c.b16 %v691, %v690
  %708 = vmatprep.subr.bf16.mxu0 0
  %709 = vmatpush1.bf16.msra.mxu0 %v692
  %710 = vmatprep.subr.bf16.mxu0 0
  %711 = vmatpush1.bf16.msra.mxu0 %v693
  %712 = vmatprep.subr.bf16.mxu0 0
  %713 = vmatpush1.bf16.msra.mxu0 %v694
  %714 = vmatprep.subr.bf16.mxu0 0
  %715 = vmatpush1.bf16.msra.mxu0 %v695
  %716 = vmatprep.subr.bf16.mxu0 0
  %717 = vmatpush1.bf16.msra.mxu0 %v696
  %718 = vmatprep.subr.bf16.mxu0 0
  %719 = vmatpush1.bf16.msra.mxu0 %v697
  %720 = vmatprep.subr.bf16.mxu0 0
  %721 = vmatpush1.bf16.msra.mxu0 %v698
  %722 = vmatprep.subr.bf16.mxu0 0
  %723 = vmatpush1.bf16.msra.mxu0 %v699
  %724 = vmatprep.subr.bf16.mxu0 0
  %725 = vmatpush1.bf16.msra.mxu0 0
  %726 = vmatprep.subr.bf16.mxu0 0
  %727 = vmatpush1.bf16.msra.mxu0 0
  %728 = vmatprep.subr.bf16.mxu0 0
  %729 = vmatpush1.bf16.msra.mxu0 0
  %730 = vmatprep.subr.bf16.mxu0 0
  %731 = vmatpush1.bf16.msra.mxu0 0
  %732 = vmatprep.subr.bf16.mxu0 0
  %733 = vmatpush1.bf16.msra.mxu0 0
  %734 = vmatprep.subr.bf16.mxu0 0
  %735 = vmatpush1.bf16.msra.mxu0 0
  %736 = vmatprep.subr.bf16.mxu0 0
  %737 = vmatpush1.bf16.msra.mxu0 0
  %738 = vmatprep.subr.bf16.mxu0 0
  %739 = vmatpush1.bf16.msra.mxu0 0
  %740 = vmatprep.mubr.bf16.mxu0 0
  %741 = vmatmul.mubr.bf16.gmra.mrb[0].mxu0 %v638
  %v742 = vpop.f32.mrb[0].mxu0
  %v743 = vadd.f32 0.0, %v742
  %v744 = vpop.f32.mrb[0].mxu0
  %v745 = vpop.f32.mrb[0].mxu0
  %v746 = vpop.f32.mrb[0].mxu0
  %747 = vdwg.mxu0
  %s748 = scalar_lea.vmem %s0, 20
  %v749 = vld [vmem:[%s748] sm:$0xf]
  %v750 = vunpack.c.l.bf16 %v749
  %v751 = vadd.f32 %v643, %v750
  %v752 = vadd.f32 %v751, %v743
  %vm753 = vcmp.gt.f32.partialorder %v752, 0.5
  %754 = vst [vmem:[#allocation2] sm:$0xff] %v752
  %v755 = vsel %vm753, 1, 0
  %v756 = vcvt.s32.f32 %v755
  %v757 = vpack.c.bf16 %v756, %v756
  %758 = vst [vmem:[#allocation3] sm:$0xf] %v757
  %v759 = vld [vmem:[%s2] sm:$0xff]
  %v760 = vadd.f32 %v759, %v756
  %761 = vst [vmem:[%s2] sm:$0xff] %v760
  %v762 = vld [vmem:[#allocation3] sm:$0xf]
  %v763 = vld [vmem:[#allocation2] sm:$0xff]
  %v764 = vunpack.c.l.bf16 %v762
  %v765 = vsub.f32 1.0, %v764
  %v766 = vmul.f32 %v765, 0.2
  %v767 = vmul.f32 %v763, %v766
  %v768 = vld [vmem:[%s1] sm:$0xf]
  %v769 = vld [vmem:[%s1 + $0x4] sm:$0xf]
  %v770 = vld [vmem:[%s1 + $0x8] sm:$0xf]
  %v771 = vld [vmem:[%s1 + $0xc] sm:$0xf]
  %v772 = vld [vmem:[%s1 + $0x10] sm:$0xf]
  %v773 = vld [vmem:[%s1 + $0x14] sm:$0xf]
  %v774 = vld [vmem:[%s1 + $0x18] sm:$0xf]
  %v775 = vld [vmem:[%s1 + $0x1c] sm:$0xf]
  %v776 = vld [vmem:[%s1 + $0x20] sm:$0xf]
  %v777 = vld [vmem:[%s1 + $0x24] sm:$0xf]
  %v778 = vld [vmem:[%s1 + $0x28] sm:$0xf]
  %v779 = vld [vmem:[%s1 + $0x2c] sm:$0xf]
  %v780 = vld [vmem:[%s1 + $0x30] sm:$0xf]
  %v781 = vld [vmem:[%s1 + $0x34] sm:$0xf]
  %v782 = vld [vmem:[%s1 + $0x38] sm:$0xf]
  %v783 = vld [vmem:[%s1 + $0x3c] sm:$0xf]
  %v800 = vunpack.c.l.b16 %v768
  %v801 = vunpack.c.l.b16 %v769
  %v802 = vunpack.c.l.b16 %v770
  %v803 = vunpack.c.l.b16 %v771
  %v804 = vunpack.c.l.b16 %v772
  %v805 = vunpack.c.l.b16 %v773
  %v806 = vunpack.c.l.b16 %v774
  %v807 = vunpack.c.l.b16 %v775
  %v808 = vunpack.c.l.b16 %v776
  %v809 = vunpack.c.l.b16 %v777
  %v810 = vunpack.c.l.b16 %v778
  %v811 = vunpack.c.l.b16 %v779
  %v812 = vunpack.c.l.b16 %v780
  %v813 = vunpack.c.l.b16 %v781
  %v814 = vunpack.c.l.b16 %v782
  %v815 = vunpack.c.l.b16 %v783
  %v816 = vpack.c.b16 %v801, %v800
  %v817 = vpack.c.b16 %v803, %v802
  %v818 = vpack.c.b16 %v805, %v804
  %v819 = vpack.c.b16 %v807, %v806
  %v820 = vpack.c.b16 %v809, %v808
  %v821 = vpack.c.b16 %v811, %v810
  %v822 = vpack.c.b16 %v813, %v812
  %v823 = vpack.c.b16 %v815, %v814
  %832 = vmatprep.subr.bf16.mxu0 0
  %833 = vmatpush1.bf16.msra.mxu0 %v816
  %834 = vmatprep.subr.bf16.mxu0 0
  %835 = vmatpush1.bf16.msra.mxu0 %v817
  %836 = vmatprep.subr.bf16.mxu0 0
  %837 = vmatpush1.bf16.msra.mxu0 %v818
  %838 = vmatprep.subr.bf16.mxu0 0
  %839 = vmatpush1.bf16.msra.mxu0 %v819
  %840 = vmatprep.subr.bf16.mxu0 0
  %841 = vmatpush1.bf16.msra.mxu0 %v820
  %842 = vmatprep.subr.bf16.mxu0 0
  %843 = vmatpush1.bf16.msra.mxu0 %v821
  %844 = vmatprep.subr.bf16.mxu0 0
  %845 = vmatpush1.bf16.msra.mxu0 %v822
  %846 = vmatprep.subr.bf16.mxu0 0
  %847 = vmatpush1.bf16.msra.mxu0 %v823
  %848 = vmatprep.subr.bf16.mxu0 0
  %849 = vmatpush1.bf16.msra.mxu0 0
  %850 = vmatprep.subr.bf16.mxu0 0
  %851 = vmatpush1.bf16.msra.mxu0 0
  %852 = vmatprep.subr.bf16.mxu0 0
  %853 = vmatpush1.bf16.msra.mxu0 0
  %854 = vmatprep.subr.bf16.mxu0 0
  %855 = vmatpush1.bf16.msra.mxu0 0
  %856 = vmatprep.subr.bf16.mxu0 0
  %857 = vmatpush1.bf16.msra.mxu0 0
  %858 = vmatprep.subr.bf16.mxu0 0
  %859 = vmatpush1.bf16.msra.mxu0 0
  %860 = vmatprep.subr.bf16.mxu0 0
  %861 = vmatpush1.bf16.msra.mxu0 0
  %862 = vmatprep.subr.bf16.mxu0 0
  %863 = vmatpush1.bf16.msra.mxu0 0
  %864 = vmatprep.mubr.bf16.mxu0 0
  %865 = vmatmul.mubr.bf16.gmra.mrb[0].mxu0 %v762
  %v866 = vpop.f32.mrb[0].mxu0
  %v867 = vadd.f32 0.0, %v866
  %v868 = vpop.f32.mrb[0].mxu0
  %v869 = vpop.f32.mrb[0].mxu0
  %v870 = vpop.f32.mrb[0].mxu0
  %871 = vdwg.mxu0
  %s872 = scalar_lea.vmem %s0, 24
  %v873 = vld [vmem:[%s872] sm:$0xf]
  %v874 = vunpack.c.l.bf16 %v873
  %v875 = vadd.f32 %v767, %v874
  %v876 = vadd.f32 %v875, %v867
  %vm877 = vcmp.gt.f32.partialorder %v876, 0.5
  %878 = vst [vmem:[#allocation2] sm:$0xff] %v876
  %v879 = vsel %vm877, 1, 0
  %v880 = vcvt.s32.f32 %v879
  %v881 = vpack.c.bf16 %v880, %v880
  %882 = vst [vmem:[#allocation3] sm:$0xf] %v881
  %v883 = vld [vmem:[%s2] sm:$0xff]
  %v884 = vadd.f32 %v883, %v880
  %885 = vst [vmem:[%s2] sm:$0xff] %v884
  %v886 = vld [vmem:[#allocation3] sm:$0xf]
  %v887 = vld [vmem:[#allocation2] sm:$0xff]
  %v888 = vunpack.c.l.bf16 %v886
  %v889 = vsub.f32 1.0, %v888
  %v890 = vmul.f32 %v889, 0.2
  %v891 = vmul.f32 %v887, %v890
  %v892 = vld [vmem:[%s1] sm:$0xf]
  %v893 = vld [vmem:[%s1 + $0x4] sm:$0xf]
  %v894 = vld [vmem:[%s1 + $0x8] sm:$0xf]
  %v895 = vld [vmem:[%s1 + $0xc] sm:$0xf]
  %v896 = vld [vmem:[%s1 + $0x10] sm:$0xf]
  %v897 = vld [vmem:[%s1 + $0x14] sm:$0xf]
  %v898 = vld [vmem:[%s1 + $0x18] sm:$0xf]
  %v899 = vld [vmem:[%s1 + $0x1c] sm:$0xf]
  %v900 = vld [vmem:[%s1 + $0x20] sm:$0xf]
  %v901 = vld [vmem:[%s1 + $0x24] sm:$0xf]
  %v902 = vld [vmem:[%s1 + $0x28] sm:$0xf]
  %v903 = vld [vmem:[%s1 + $0x2c] sm:$0xf]
  %v904 = vld [vmem:[%s1 + $0x30] sm:$0xf]
  %v905 = vld [vmem:[%s1 + $0x34] sm:$0xf]
  %v906 = vld [vmem:[%s1 + $0x38] sm:$0xf]
  %v907 = vld [vmem:[%s1 + $0x3c] sm:$0xf]
  %v924 = vunpack.c.l.b16 %v892
  %v925 = vunpack.c.l.b16 %v893
  %v926 = vunpack.c.l.b16 %v894
  %v927 = vunpack.c.l.b16 %v895
  %v928 = vunpack.c.l.b16 %v896
  %v929 = vunpack.c.l.b16 %v897
  %v930 = vunpack.c.l.b16 %v898
  %v931 = vunpack.c.l.b16 %v899
  %v932 = vunpack.c.l.b16 %v900
  %v933 = vunpack.c.l.b16 %v901
  %v934 = vunpack.c.l.b16 %v902
  %v935 = vunpack.c.l.b16 %v903
  %v936 = vunpack.c.l.b16 %v904
  %v937 = vunpack.c.l.b16 %v905
  %v938 = vunpack.c.l.b16 %v906
  %v939 = vunpack.c.l.b16 %v907
  %v940 = vpack.c.b16 %v925, %v924
  %v941 = vpack.c.b16 %v927, %v926
  %v942 = vpack.c.b16 %v929, %v928
  %v943 = vpack.c.b16 %v931, %v930
  %v944 = vpack.c.b16 %v933, %v932
  %v945 = vpack.c.b16 %v935, %v934
  %v946 = vpack.c.b16 %v937, %v936
  %v947 = vpack.c.b16 %v939, %v938
  %956 = vmatprep.subr.bf16.mxu0 0
  %957 = vmatpush1.bf16.msra.mxu0 %v940
  %958 = vmatprep.subr.bf16.mxu0 0
  %959 = vmatpush1.bf16.msra.mxu0 %v941
  %960 = vmatprep.subr.bf16.mxu0 0
  %961 = vmatpush1.bf16.msra.mxu0 %v942
  %962 = vmatprep.subr.bf16.mxu0 0
  %963 = vmatpush1.bf16.msra.mxu0 %v943
  %964 = vmatprep.subr.bf16.mxu0 0
  %965 = vmatpush1.bf16.msra.mxu0 %v944
  %966 = vmatprep.subr.bf16.mxu0 0
  %967 = vmatpush1.bf16.msra.mxu0 %v945
  %968 = vmatprep.subr.bf16.mxu0 0
  %969 = vmatpush1.bf16.msra.mxu0 %v946
  %970 = vmatprep.subr.bf16.mxu0 0
  %971 = vmatpush1.bf16.msra.mxu0 %v947
  %972 = vmatprep.subr.bf16.mxu0 0
  %973 = vmatpush1.bf16.msra.mxu0 0
  %974 = vmatprep.subr.bf16.mxu0 0
  %975 = vmatpush1.bf16.msra.mxu0 0
  %976 = vmatprep.subr.bf16.mxu0 0
  %977 = vmatpush1.bf16.msra.mxu0 0
  %978 = vmatprep.subr.bf16.mxu0 0
  %979 = vmatpush1.bf16.msra.mxu0 0
  %980 = vmatprep.subr.bf16.mxu0 0
  %981 = vmatpush1.bf16.msra.mxu0 0
  %982 = vmatprep.subr.bf16.mxu0 0
  %983 = vmatpush1.bf16.msra.mxu0 0
  %984 = vmatprep.subr.bf16.mxu0 0
  %985 = vmatpush1.bf16.msra.mxu0 0
  %986 = vmatprep.subr.bf16.mxu0 0
  %987 = vmatpush1.bf16.msra.mxu0 0
  %988 = vmatprep.mubr.bf16.mxu0 0
  %989 = vmatmul.mubr.bf16.gmra.mrb[0].mxu0 %v886
  %v990 = vpop.f32.mrb[0].mxu0
  %v991 = vadd.f32 0.0, %v990
  %v992 = vpop.f32.mrb[0].mxu0
  %v993 = vpop.f32.mrb[0].mxu0
  %v994 = vpop.f32.mrb[0].mxu0
  %995 = vdwg.mxu0
  %s996 = scalar_lea.vmem %s0, 28
  %v997 = vld [vmem:[%s996] sm:$0xf]
  %v998 = vunpack.c.l.bf16 %v997
  %v999 = vadd.f32 %v891, %v998
  %v1000 = vadd.f32 %v999, %v991
  %vm1001 = vcmp.gt.f32.partialorder %v1000, 0.5
  %1002 = vst [vmem:[#allocation2] sm:$0xff] %v1000
  %v1003 = vsel %vm1001, 1, 0
  %v1004 = vcvt.s32.f32 %v1003
  %v1005 = vpack.c.bf16 %v1004, %v1004
  %1006 = vst [vmem:[#allocation3] sm:$0xf] %v1005
  %v1007 = vld [vmem:[%s2] sm:$0xff]
  %v1008 = vadd.f32 %v1007, %v1004
  %1009 = vst [vmem:[%s2] sm:$0xff] %v1008
  // Predicated region
  $region14: #{srnn_forward.3} parent=0 // pred_check
    _
  $region15: #{srnn_forward.3} parent=0 // pred_check_branch
    %1011 = sbr.rel (0) target = $region17
  $region16: #{srnn_forward.3} parent=0 // pred_region
    _
  $region17: #{srnn_forward.3} parent=0 // pred_fallthru
    _
  // Predicated region
  $region18: #{srnn_forward.3} parent=0 // pred_check
    _
  $region19: #{srnn_forward.3} parent=0 // pred_check_branch
    %1013 = sbr.rel (0) target = $region21
  $region20: #{srnn_forward.3} parent=0 // pred_region
    _
  $region21: #{srnn_forward.3} parent=0 // pred_fallthru
    _

</llo_original>
